<compile_context>
chip_gen: v7x
topology: tpu7x:2x2x1
jax: 0.10.0
libtpu: 0.0.40
codegen_flags: <defaults>
</compile_context>

<pallas_src>
import functools

import jax
import jax.numpy as jnp
from jax.experimental import pallas as pl
from jax.experimental.pallas import tpu as pltpu

O_PAD = 128  # encoder feature dim (output_size=100) padded to a full lane tile


def _vmem_spec():
    # whole-array block, resident in VMEM (no grid -> single kernel invocation)
    return pl.BlockSpec(memory_space=pltpu.MemorySpace.VMEM)


# --------------------------------------------------------------------------
# Fused kernel. Row layout inside the kernel is TIME-MAJOR: row m = t*B + b.
# --------------------------------------------------------------------------
def _edge_labeller_kernel(gidx_ref, x_ref, wih_ref, b_ref, whh_ref,
                          wenc_ref, benc_ref, uflat_ref, sel_ref,
                          out_ref, hcat_ref, *, B, T, H):
    N = B * T
    H2, H4, H6, H8 = 2 * H, 4 * H, 6 * H, 8 * H
    L = out_ref.shape[1]

    # ---- 1. hoisted input projection: both directions + both biases, 1 matmul
    #      combined gate-column layout: [i_f|i_b|f_f|f_b|o_f|o_b|g_f|g_b]
    #      row block s of x_ref carries x(t=s) for fwd and x(t=T-1-s) for bwd.
    xp = (jnp.dot(x_ref[...], wih_ref[...],
                  preferred_element_type=jnp.float32) + b_ref[...])   # (N, 8H)

    whh = whh_ref[...]                                                # (2H, 8H)

    # ---- 2. interleaved BiLSTM recurrence (fwd step s || bwd step T-1-s) ----
    h = jnp.zeros((B, H2), jnp.float32)        # [h_f | h_b]
    c = jnp.zeros((B, H2), jnp.float32)        # [c_f | c_b]
    for s in range(T):
        g = xp[s * B:(s + 1) * B, :] + jnp.dot(
            h, whh, preferred_element_type=jnp.float32)               # (B, 8H)
        sig = jax.nn.sigmoid(g[:, 0:H6])       # one sigmoid for i,f,o (both dirs)
        i_g = sig[:, 0:H2]
        f_g = sig[:, H2:H4]
        o_g = sig[:, H4:H6]
        g_g = jnp.tanh(g[:, H6:H8])            # one tanh for the cell candidate
        c = f_g * c + i_g * g_g
        h = o_g * jnp.tanh(c)
        # scratch stores bound vreg pressure; row m = t*B + b (time-major)
        hcat_ref[s * B:(s + 1) * B, 0:H] = h[:, 0:H]                # fwd, t = s
        hcat_ref[(T - 1 - s) * B:(T - s) * B, H:H2] = h[:, H:H2]    # bwd, t = T-1-s

    hcat = hcat_ref[...]                                              # (N, 2H)

    # ---- 3. fused dep+head encoder: ONE matmul, 256-lane output --------------
    # TODO(synk): MLP class not provided in the reference; modeled as a single
    #             Linear(2H, output_size) + ReLU per encoder.
    # Lane 100 of each half is a constant 1 (bias trick) so the linear scoring
    # term + its bias can live in u_flat's pad lanes.
    enc = jnp.maximum(
        jnp.dot(hcat, wenc_ref[...], preferred_element_type=jnp.float32)
        + benc_ref[...], 0.0)                                         # (N, 2*O_PAD)
    h_dep = enc[:, 0:O_PAD]
    h_head_raw = enc[:, O_PAD:2 * O_PAD]

    # ---- 4. in-kernel heads gather (rows are VMEM resident) -----------------
    gidx = gidx_ref[...]                                              # (N, 1) int32
    col = jax.lax.broadcasted_iota(jnp.int32, (N, N), 1)
    onehot = (col == gidx).astype(jnp.float32)                        # (N, N)
    h_head = jnp.dot(onehot, h_head_raw,
                     preferred_element_type=jnp.float32)              # (N, O_PAD)

    # ---- 5. bilinear + folded linear + bias as one lane-dense matmul chain ---
    hhU = jnp.dot(h_head, uflat_ref[...],
                  preferred_element_type=jnp.float32)                 # (N, L*O_PAD)
    hd_tiled = jnp.concatenate([h_dep] * L, axis=-1)                  # (N, L*O_PAD)
    out_ref[...] = jnp.dot(hhU * hd_tiled, sel_ref[...],
                           preferred_element_type=jnp.float32)        # (N, L)


def fused_edge_labeller(gidx, x_aug, kp, *, B, T, H, L):
    N = B * T
    I2 = x_aug.shape[1]
    kernel = functools.partial(_edge_labeller_kernel, B=B, T=T, H=H)
    args = (gidx, x_aug, kp["wih_aug"], kp["b_aug"], kp["whh_blk"],
            kp["w_enc"], kp["b_enc"], kp["u_flat"], kp["sel"])

    flops = (2 * N * I2 * 8 * H              # input projection
             + 2 * T * B * 2 * H * 8 * H     # recurrence
             + 2 * N * 2 * H * 2 * O_PAD     # fused encoders
             + 2 * N * N * O_PAD             # heads gather (one-hot matmul)
             + 2 * N * O_PAD * L * O_PAD     # bilinear hhU
             + N * L * O_PAD                 # elementwise multiply
             + 2 * N * L * O_PAD * L)        # block-sum reduction
    transcendentals = T * B * 10 * H         # sigmoid(6H)+tanh(2H)+tanh(2H) per step
    bytes_accessed = 4 * (sum(int(a.size) for a in args) + N * L)

    return pl.pallas_call(
        kernel,
        out_shape=jax.ShapeDtypeStruct((N, L), jnp.float32),
        in_specs=[_vmem_spec()] * len(args),
        out_specs=_vmem_spec(),
        scratch_shapes=[pltpu.VMEM((N, 2 * H), jnp.float32)],
        cost_estimate=pl.CostEstimate(flops=flops,
                                      transcendentals=transcendentals,
                                      bytes_accessed=bytes_accessed),
    )(*args)


# --------------------------------------------------------------------------
# Parameter construction (logical shapes) + kernel-layout preparation.
# --------------------------------------------------------------------------
def make_params(key, vocab_size, word_dim, pos_dim, num_pos_tags,
                hidden_size, output_size, num_labels):
    ks = jax.random.split(key, 16)
    I = word_dim + pos_dim
    H = hidden_size
    s = 0.1

    def nrm(k, shape):
        return (s * jax.random.normal(k, shape)).astype(jnp.float32)

    return {
        "word_emb":     nrm(ks[0], (vocab_size, word_dim)),
        "pos_emb":      nrm(ks[1], (num_pos_tags, pos_dim)),
        "tagger_table": nrm(ks[2], (vocab_size, num_pos_tags)),
        "wih_f": nrm(ks[3], (I, 4 * H)), "whh_f": nrm(ks[4], (H, 4 * H)),
        "b_f":   nrm(ks[5], (1, 4 * H)),
        "wih_b": nrm(ks[6], (I, 4 * H)), "whh_b": nrm(ks[7], (H, 4 * H)),
        "b_b":   nrm(ks[8], (1, 4 * H)),
        "wd": nrm(ks[9], (2 * H, output_size)),  "bd": nrm(ks[10], (1, output_size)),
        "wh": nrm(ks[11], (2 * H, output_size)), "bh": nrm(ks[12], (1, output_size)),
        "u_rel": nrm(ks[13], (num_labels, output_size, output_size)),
        "wl": nrm(ks[14], (2 * output_size, num_labels)),
        "bl": nrm(ks[15], (1, num_labels)),
    }


def prepare_kernel_params(params, hidden_size, output_size):
    """Pre-split / pre-permute / pre-pad weights into the fused-kernel layouts.

    * Gate columns are permuted to [i_f|i_b|f_f|f_b|o_f|o_b|g_f|g_b] so the
      kernel applies one sigmoid (6H lanes) and one tanh (2H lanes) per step.
    * Whh is block-diagonal over the fwd/bwd hidden halves -> one matmul/step.
    * The encoder weights are fused into one (2H, 2*O_PAD) matrix; lane 100 of
      each half is forced to a constant 1 after ReLU (zero weights, bias 1).
    * The linear score term + bias are folded into u_flat via that lane.
    Padding lanes are zero-filled, so scores match the reference numerics.
    """
    H = hidden_size
    O = output_size
    L = params["wl"].shape[1]
    I = params["wih_f"].shape[0]

    def gates(w):  # split torch gate order (i, f, g, o)
        return w[:, 0:H], w[:, H:2 * H], w[:, 2 * H:3 * H], w[:, 3 * H:4 * H]

    # ---- augmented input projection weight (2I, 8H), block structure --------
    i_f, f_f, g_f, o_f = gates(params["wih_f"])
    i_b, f_b, g_b, o_b = gates(params["wih_b"])
    Zi = jnp.zeros((I, H), jnp.float32)
    wih_top = jnp.concatenate([i_f, Zi, f_f, Zi, o_f, Zi, g_f, Zi], axis=1)
    wih_bot = jnp.concatenate([Zi, i_b, Zi, f_b, Zi, o_b, Zi, g_b], axis=1)
    wih_aug = jnp.concatenate([wih_top, wih_bot], axis=0)            # (2I, 8H)

    bi_f, bf_f, bg_f, bo_f = gates(params["b_f"])
    bi_b, bf_b, bg_b, bo_b = gates(params["b_b"])
    b_aug = jnp.concatenate([bi_f, bi_b, bf_f, bf_b,
                             bo_f, bo_b, bg_f, bg_b], axis=1)        # (1, 8H)

    # ---- block-diagonal recurrent weight (2H, 8H) ---------------------------
    hi_f, hf_f, hg_f, ho_f = gates(params["whh_f"])
    hi_b, hf_b, hg_b, ho_b = gates(params["whh_b"])
    Zh = jnp.zeros((H, H), jnp.float32)
    whh_top = jnp.concatenate([hi_f, Zh, hf_f, Zh, ho_f, Zh, hg_f, Zh], axis=1)
    whh_bot = jnp.concatenate([Zh, hi_b, Zh, hf_b, Zh, ho_b, Zh, hg_b], axis=1)
    whh_blk = jnp.concatenate([whh_top, whh_bot], axis=0)            # (2H, 8H)

    def pad_cols(w):
        return jnp.pad(w, ((0, 0), (0, O_PAD - w.shape[1])))

    # ---- fused encoder: cols 0:O_PAD -> dep, O_PAD:2*O_PAD -> head ----------
    w_enc = jnp.concatenate([pad_cols(params["wd"]),
                             pad_cols(params["wh"])], axis=1)        # (2H, 256)
    bd_p = pad_cols(params["bd"]).at[0, O].set(1.0)   # constant-1 lane after ReLU
    bh_p = pad_cols(params["bh"]).at[0, O].set(1.0)
    b_enc = jnp.concatenate([bd_p, bh_p], axis=1)                    # (1, 256)

    # ---- bilinear tensor with linear term + bias folded into pad lane O -----
    u = params["u_rel"]                                              # (L, O, O)
    u_pad = jnp.pad(u, ((0, 0), (0, O_PAD - O), (0, O_PAD - O)))
    u_pad = u_pad.at[:, :O, O].set(params["wl"][:O, :].T)   # head linear term
    u_pad = u_pad.at[:, O, :O].set(params["wl"][O:, :].T)   # dep  linear term
    u_pad = u_pad.at[:, O, O].set(params["bl"][0, :])       # bias
    # u_flat[o1, l*O_PAD + o2] = U[l, o1, o2]
    u_flat = jnp.transpose(u_pad, (1, 0, 2)).reshape(O_PAD, L * O_PAD)
    # block-sum selection matrix: sel[l*O_PAD + o, l'] = (l == l')
    sel = jnp.repeat(jnp.eye(L, dtype=jnp.float32), O_PAD, axis=0)   # (L*O_PAD, L)

    return {
        "word_emb": params["word_emb"],
        "pos_emb": params["pos_emb"],
        "tagger_table": params["tagger_table"],
        "wih_aug": wih_aug, "b_aug": b_aug, "whh_blk": whh_blk,
        "w_enc": w_enc, "b_enc": b_enc,
        "u_flat": u_flat, "sel": sel,
    }


# --------------------------------------------------------------------------
# EdgeLabeller forward
# --------------------------------------------------------------------------
def edge_labeller_forward(batch, kp):
    WORDS, POS, HEADS = 0, 1, 2                  # POS row unused, as in ref
    words = batch[:, WORDS, :]
    heads = batch[:, HEADS, :]
    B, T = words.shape
    H = kp["whh_blk"].shape[0] // 2
    L = kp["sel"].shape[1]

    # embedding lookups (data-dependent HBM gathers -> plain JAX glue)
    words_embedded = kp["word_emb"][words]
    # TODO(synk): pos_tagger is an external module in the reference; modeled as
    #             a per-word logit table followed by the `.predict` argmax.
    pos_tags = jnp.argmax(kp["tagger_table"][words], axis=-1)
    pos_embedded = kp["pos_emb"][pos_tags]
    lstm_inputs = jnp.concatenate([words_embedded, pos_embedded], axis=2)  # (B,T,I)
    I = lstm_inputs.shape[-1]

    # time-major flattening (row m = t*B + b) + lane-concatenated time-reversed
    # copy so the kernel's single input projection yields, in row block s,
    # fwd gates for time s AND bwd gates for time T-1-s (interleaved BiLSTM).
    x_tm = jnp.transpose(lstm_inputs, (1, 0, 2)).reshape(T * B, I)
    x_rev = jnp.transpose(lstm_inputs[:, ::-1, :], (1, 0, 2)).reshape(T * B, I)
    x_aug = jnp.concatenate([x_tm, x_rev], axis=1)                   # (N, 2I)

    # gather indices for the in-kernel heads gather (same time-major order);
    # the hard-coded 100 in the reference gather equals output_size.
    gidx_tm = ((heads.astype(jnp.int32) * B
                + jnp.arange(B, dtype=jnp.int32)[:, None])
               .T.reshape(T * B, 1))

    scores_tm = fused_edge_labeller(gidx_tm, x_aug, kp, B=B, T=T, H=H, L=L)
    return jnp.transpose(scores_tm.reshape(T, B, L), (1, 0, 2))      # (B, T, L)


# --------------------------------------------------------------------------
# Pure-JAX reference (mirrors the original torch forward) for a sanity check.
# --------------------------------------------------------------------------
def _reference_forward(batch, params):
    words = batch[:, 0, :]
    heads = batch[:, 2, :]
    we = params["word_emb"][words]
    pt = jnp.argmax(params["tagger_table"][words], axis=-1)
    pe = params["pos_emb"][pt]
    x = jnp.concatenate([we, pe], axis=2)
    B, T, _ = x.shape
    H = params["whh_f"].shape[0]

    def run_dir(wih, whh, b, reverse):
        h = jnp.zeros((B, H), jnp.float32)
        c = jnp.zeros((B, H), jnp.float32)
        outs = [None] * T
        ts = range(T - 1, -1, -1) if reverse else range(T)
        for t in ts:
            g = x[:, t, :] @ wih + h @ whh + b
            i = jax.nn.sigmoid(g[:, :H])
            f = jax.nn.sigmoid(g[:, H:2 * H])
            gg = jnp.tanh(g[:, 2 * H:3 * H])
            o = jax.nn.sigmoid(g[:, 3 * H:])
            c = f * c + i * gg
            h = o * jnp.tanh(c)
            outs[t] = h
        return jnp.stack(outs, axis=1)

    fwd = run_dir(params["wih_f"], params["whh_f"], params["b_f"], False)
    bwd = run_dir(params["wih_b"], params["whh_b"], params["b_b"], True)
    flat = jnp.concatenate([fwd, bwd], axis=2).reshape(B * T, 2 * H)
    h_dep = jax.nn.relu(flat @ params["wd"] + params["bd"]).reshape(B, T, -1)
    h_head_raw = jax.nn.relu(flat @ params["wh"] + params["bh"]).reshape(B, T, -1)
    O = h_dep.shape[-1]
    idx = jnp.broadcast_to(heads[:, :, None], (B, T, O))
    h_head = jnp.take_along_axis(h_head_raw, idx, axis=1)
    hh = h_head.reshape(B * T, O)
    hd = h_dep.reshape(B * T, O)
    L = params["u_rel"].shape[0]
    bil = jnp.einsum('no,lop,np->nl', hh, params["u_rel"], hd)
    lin = jnp.concatenate([hh, hd], axis=-1) @ params["wl"] + params["bl"]
    return (bil + lin).reshape(B, T, L)


if __name__ == "__main__":
    B, T = 2, 8
    vocab_size, word_dim, pos_dim, num_pos_tags = 32, 16, 8, 8
    hidden_size = 16
    output_size = 100            # matches the hard-coded 100 in the reference gather
    num_labels = 8

    key = jax.random.PRNGKey(0)
    k_par, k_w, k_p, k_h = jax.random.split(key, 4)

    params = make_params(k_par, vocab_size, word_dim, pos_dim, num_pos_tags,
                         hidden_size, output_size, num_labels)
    kparams = prepare_kernel_params(params, hidden_size, output_size)

    words = jax.random.randint(k_w, (B, T), 0, vocab_size)
    pos = jax.random.randint(k_p, (B, T), 0, num_pos_tags)
    heads = jax.random.randint(k_h, (B, T), 0, T)
    batch = jnp.stack([words, pos, heads], axis=1).astype(jnp.int32)   # (B, 3, T)

    scores = jax.jit(edge_labeller_forward)(batch, kparams)
    jax.block_until_ready(scores)
    assert scores.shape == (B, T, num_labels)

    ref = _reference_forward(batch, params)
    assert jnp.allclose(scores, ref, atol=1e-3, rtol=1e-3), \
        float(jnp.max(jnp.abs(scores - ref)))

    print("KERNEL_OK")
</pallas_src>

<mosaic_0001>
module attributes {stable_mosaic.version = 11 : i64} {
  func.func @_edge_labeller_kernel(%arg0: memref<16x1xi32, #tpu.memory_space<vmem>>, %arg1: memref<16x48xf32, #tpu.memory_space<vmem>>, %arg2: memref<48x128xf32, #tpu.memory_space<vmem>>, %arg3: memref<1x128xf32, #tpu.memory_space<vmem>>, %arg4: memref<32x128xf32, #tpu.memory_space<vmem>>, %arg5: memref<32x256xf32, #tpu.memory_space<vmem>>, %arg6: memref<1x256xf32, #tpu.memory_space<vmem>>, %arg7: memref<128x1024xf32, #tpu.memory_space<vmem>>, %arg8: memref<1024x8xf32, #tpu.memory_space<vmem>>, %arg9: memref<16x8xf32, #tpu.memory_space<vmem>>, %arg10: memref<16x32xf32, #tpu.memory_space<vmem>>) attributes {dimension_semantics = [], scalar_prefetch = 0 : i64, scratch_operands = 1 : i64, tpu.core_type = #tpu.core_type<tc>} {
    %c0 = arith.constant 0 : index
    %c0_0 = arith.constant 0 : index
    %0 = vector.load %arg1[%c0, %c0_0] : memref<16x48xf32, #tpu.memory_space<vmem>>, vector<16x48xf32>
    %c0_1 = arith.constant 0 : index
    %c0_2 = arith.constant 0 : index
    %1 = vector.load %arg2[%c0_1, %c0_2] : memref<48x128xf32, #tpu.memory_space<vmem>>, vector<48x128xf32>
    %cst = arith.constant dense<0.000000e+00> : vector<16x128xf32>
    %2 = tpu.matmul %0, %1, %cst {dimension_numbers = #tpu.dot_dimension_numbers<[1], [0], [0], [1], [0, 0, 1, 1], [], []>} : vector<16x48xf32>, vector<48x128xf32>, vector<16x128xf32> -> vector<16x128xf32>
    %c0_3 = arith.constant 0 : index
    %c0_4 = arith.constant 0 : index
    %3 = vector.load %arg3[%c0_3, %c0_4] : memref<1x128xf32, #tpu.memory_space<vmem>>, vector<1x128xf32>
    %4 = vector.broadcast %3 : vector<1x128xf32> to vector<16x128xf32>
    %5 = arith.addf %2, %4 : vector<16x128xf32>
    %c0_5 = arith.constant 0 : index
    %c0_6 = arith.constant 0 : index
    %6 = vector.load %arg4[%c0_5, %c0_6] : memref<32x128xf32, #tpu.memory_space<vmem>>, vector<32x128xf32>
    %cst_7 = arith.constant 0.000000e+00 : f32
    %7 = vector.broadcast %cst_7 : f32 to vector<2x32xf32>
    %cst_8 = arith.constant 0.000000e+00 : f32
    %8 = vector.broadcast %cst_8 : f32 to vector<2x32xf32>
    %9 = vector.extract_strided_slice %5 {offsets = [0, 0], sizes = [2, 128], strides = [1, 1]} : vector<16x128xf32> to vector<2x128xf32>
    %cst_9 = arith.constant dense<0.000000e+00> : vector<2x128xf32>
    %10 = tpu.matmul %7, %6, %cst_9 {dimension_numbers = #tpu.dot_dimension_numbers<[1], [0], [0], [1], [0, 0, 1, 1], [], []>} : vector<2x32xf32>, vector<32x128xf32>, vector<2x128xf32> -> vector<2x128xf32>
    %11 = arith.addf %9, %10 : vector<2x128xf32>
    %12 = vector.extract_strided_slice %11 {offsets = [0, 0], sizes = [2, 96], strides = [1, 1]} : vector<2x128xf32> to vector<2x96xf32>
    %13 = arith.negf %12 : vector<2x96xf32>
    %14 = math.exp %13 : vector<2x96xf32>
    %cst_10 = arith.constant 1.000000e+00 : f32
    %15 = vector.broadcast %cst_10 : f32 to vector<2x96xf32>
    %16 = arith.addf %15, %14 : vector<2x96xf32>
    %17 = arith.divf %15, %16 : vector<2x96xf32>
    %18 = vector.extract_strided_slice %17 {offsets = [0, 0], sizes = [2, 32], strides = [1, 1]} : vector<2x96xf32> to vector<2x32xf32>
    %19 = vector.extract_strided_slice %17 {offsets = [0, 32], sizes = [2, 32], strides = [1, 1]} : vector<2x96xf32> to vector<2x32xf32>
    %20 = vector.extract_strided_slice %17 {offsets = [0, 64], sizes = [2, 32], strides = [1, 1]} : vector<2x96xf32> to vector<2x32xf32>
    %21 = vector.extract_strided_slice %11 {offsets = [0, 96], sizes = [2, 32], strides = [1, 1]} : vector<2x128xf32> to vector<2x32xf32>
    %22 = math.tanh %21 : vector<2x32xf32>
    %23 = arith.mulf %19, %8 : vector<2x32xf32>
    %24 = arith.mulf %18, %22 : vector<2x32xf32>
    %25 = arith.addf %23, %24 : vector<2x32xf32>
    %26 = math.tanh %25 : vector<2x32xf32>
    %27 = arith.mulf %20, %26 : vector<2x32xf32>
    %28 = vector.extract_strided_slice %27 {offsets = [0, 0], sizes = [2, 16], strides = [1, 1]} : vector<2x32xf32> to vector<2x16xf32>
    %c0_11 = arith.constant 0 : index
    %c0_12 = arith.constant 0 : index
    %29 = vector.load %arg10[%c0_11, %c0_12] : memref<16x32xf32, #tpu.memory_space<vmem>>, vector<2x16xf32>
    tpu.vector_store %arg10[%c0_11, %c0_12], %28 {strides = array<i32>} : memref<16x32xf32, #tpu.memory_space<vmem>>, vector<2x16xf32>,
    %30 = vector.extract_strided_slice %27 {offsets = [0, 16], sizes = [2, 16], strides = [1, 1]} : vector<2x32xf32> to vector<2x16xf32>
    %c14 = arith.constant 14 : index
    %c16 = arith.constant 16 : index
    %31 = vector.load %arg10[%c14, %c16] : memref<16x32xf32, #tpu.memory_space<vmem>>, vector<2x16xf32>
    tpu.vector_store %arg10[%c14, %c16], %30 {strides = array<i32>} : memref<16x32xf32, #tpu.memory_space<vmem>>, vector<2x16xf32>,
    %32 = vector.extract_strided_slice %5 {offsets = [2, 0], sizes = [2, 128], strides = [1, 1]} : vector<16x128xf32> to vector<2x128xf32>
    %cst_13 = arith.constant dense<0.000000e+00> : vector<2x128xf32>
    %33 = tpu.matmul %27, %6, %cst_13 {dimension_numbers = #tpu.dot_dimension_numbers<[1], [0], [0], [1], [0, 0, 1, 1], [], []>} : vector<2x32xf32>, vector<32x128xf32>, vector<2x128xf32> -> vector<2x128xf32>
    %34 = arith.addf %32, %33 : vector<2x128xf32>
    %35 = vector.extract_strided_slice %34 {offsets = [0, 0], sizes = [2, 96], strides = [1, 1]} : vector<2x128xf32> to vector<2x96xf32>
    %36 = arith.negf %35 : vector<2x96xf32>
    %37 = math.exp %36 : vector<2x96xf32>
    %cst_14 = arith.constant 1.000000e+00 : f32
    %38 = vector.broadcast %cst_14 : f32 to vector<2x96xf32>
    %39 = arith.addf %38, %37 : vector<2x96xf32>
    %40 = arith.divf %38, %39 : vector<2x96xf32>
    %41 = vector.extract_strided_slice %40 {offsets = [0, 0], sizes = [2, 32], strides = [1, 1]} : vector<2x96xf32> to vector<2x32xf32>
    %42 = vector.extract_strided_slice %40 {offsets = [0, 32], sizes = [2, 32], strides = [1, 1]} : vector<2x96xf32> to vector<2x32xf32>
    %43 = vector.extract_strided_slice %40 {offsets = [0, 64], sizes = [2, 32], strides = [1, 1]} : vector<2x96xf32> to vector<2x32xf32>
    %44 = vector.extract_strided_slice %34 {offsets = [0, 96], sizes = [2, 32], strides = [1, 1]} : vector<2x128xf32> to vector<2x32xf32>
    %45 = math.tanh %44 : vector<2x32xf32>
    %46 = arith.mulf %42, %25 : vector<2x32xf32>
    %47 = arith.mulf %41, %45 : vector<2x32xf32>
    %48 = arith.addf %46, %47 : vector<2x32xf32>
    %49 = math.tanh %48 : vector<2x32xf32>
    %50 = arith.mulf %43, %49 : vector<2x32xf32>
    %51 = vector.extract_strided_slice %50 {offsets = [0, 0], sizes = [2, 16], strides = [1, 1]} : vector<2x32xf32> to vector<2x16xf32>
    %c2 = arith.constant 2 : index
    %c0_15 = arith.constant 0 : index
    %52 = vector.load %arg10[%c2, %c0_15] : memref<16x32xf32, #tpu.memory_space<vmem>>, vector<2x16xf32>
    tpu.vector_store %arg10[%c2, %c0_15], %51 {strides = array<i32>} : memref<16x32xf32, #tpu.memory_space<vmem>>, vector<2x16xf32>,
    %53 = vector.extract_strided_slice %50 {offsets = [0, 16], sizes = [2, 16], strides = [1, 1]} : vector<2x32xf32> to vector<2x16xf32>
    %c12 = arith.constant 12 : index
    %c16_16 = arith.constant 16 : index
    %54 = vector.load %arg10[%c12, %c16_16] : memref<16x32xf32, #tpu.memory_space<vmem>>, vector<2x16xf32>
    tpu.vector_store %arg10[%c12, %c16_16], %53 {strides = array<i32>} : memref<16x32xf32, #tpu.memory_space<vmem>>, vector<2x16xf32>,
    %55 = vector.extract_strided_slice %5 {offsets = [4, 0], sizes = [2, 128], strides = [1, 1]} : vector<16x128xf32> to vector<2x128xf32>
    %cst_17 = arith.constant dense<0.000000e+00> : vector<2x128xf32>
    %56 = tpu.matmul %50, %6, %cst_17 {dimension_numbers = #tpu.dot_dimension_numbers<[1], [0], [0], [1], [0, 0, 1, 1], [], []>} : vector<2x32xf32>, vector<32x128xf32>, vector<2x128xf32> -> vector<2x128xf32>
    %57 = arith.addf %55, %56 : vector<2x128xf32>
    %58 = vector.extract_strided_slice %57 {offsets = [0, 0], sizes = [2, 96], strides = [1, 1]} : vector<2x128xf32> to vector<2x96xf32>
    %59 = arith.negf %58 : vector<2x96xf32>
    %60 = math.exp %59 : vector<2x96xf32>
    %cst_18 = arith.constant 1.000000e+00 : f32
    %61 = vector.broadcast %cst_18 : f32 to vector<2x96xf32>
    %62 = arith.addf %61, %60 : vector<2x96xf32>
    %63 = arith.divf %61, %62 : vector<2x96xf32>
    %64 = vector.extract_strided_slice %63 {offsets = [0, 0], sizes = [2, 32], strides = [1, 1]} : vector<2x96xf32> to vector<2x32xf32>
    %65 = vector.extract_strided_slice %63 {offsets = [0, 32], sizes = [2, 32], strides = [1, 1]} : vector<2x96xf32> to vector<2x32xf32>
    %66 = vector.extract_strided_slice %63 {offsets = [0, 64], sizes = [2, 32], strides = [1, 1]} : vector<2x96xf32> to vector<2x32xf32>
    %67 = vector.extract_strided_slice %57 {offsets = [0, 96], sizes = [2, 32], strides = [1, 1]} : vector<2x128xf32> to vector<2x32xf32>
    %68 = math.tanh %67 : vector<2x32xf32>
    %69 = arith.mulf %65, %48 : vector<2x32xf32>
    %70 = arith.mulf %64, %68 : vector<2x32xf32>
    %71 = arith.addf %69, %70 : vector<2x32xf32>
    %72 = math.tanh %71 : vector<2x32xf32>
    %73 = arith.mulf %66, %72 : vector<2x32xf32>
    %74 = vector.extract_strided_slice %73 {offsets = [0, 0], sizes = [2, 16], strides = [1, 1]} : vector<2x32xf32> to vector<2x16xf32>
    %c4 = arith.constant 4 : index
    %c0_19 = arith.constant 0 : index
    %75 = vector.load %arg10[%c4, %c0_19] : memref<16x32xf32, #tpu.memory_space<vmem>>, vector<2x16xf32>
    tpu.vector_store %arg10[%c4, %c0_19], %74 {strides = array<i32>} : memref<16x32xf32, #tpu.memory_space<vmem>>, vector<2x16xf32>,
    %76 = vector.extract_strided_slice %73 {offsets = [0, 16], sizes = [2, 16], strides = [1, 1]} : vector<2x32xf32> to vector<2x16xf32>
    %c10 = arith.constant 10 : index
    %c16_20 = arith.constant 16 : index
    %77 = vector.load %arg10[%c10, %c16_20] : memref<16x32xf32, #tpu.memory_space<vmem>>, vector<2x16xf32>
    tpu.vector_store %arg10[%c10, %c16_20], %76 {strides = array<i32>} : memref<16x32xf32, #tpu.memory_space<vmem>>, vector<2x16xf32>,
    %78 = vector.extract_strided_slice %5 {offsets = [6, 0], sizes = [2, 128], strides = [1, 1]} : vector<16x128xf32> to vector<2x128xf32>
    %cst_21 = arith.constant dense<0.000000e+00> : vector<2x128xf32>
    %79 = tpu.matmul %73, %6, %cst_21 {dimension_numbers = #tpu.dot_dimension_numbers<[1], [0], [0], [1], [0, 0, 1, 1], [], []>} : vector<2x32xf32>, vector<32x128xf32>, vector<2x128xf32> -> vector<2x128xf32>
    %80 = arith.addf %78, %79 : vector<2x128xf32>
    %81 = vector.extract_strided_slice %80 {offsets = [0, 0], sizes = [2, 96], strides = [1, 1]} : vector<2x128xf32> to vector<2x96xf32>
    %82 = arith.negf %81 : vector<2x96xf32>
    %83 = math.exp %82 : vector<2x96xf32>
    %cst_22 = arith.constant 1.000000e+00 : f32
    %84 = vector.broadcast %cst_22 : f32 to vector<2x96xf32>
    %85 = arith.addf %84, %83 : vector<2x96xf32>
    %86 = arith.divf %84, %85 : vector<2x96xf32>
    %87 = vector.extract_strided_slice %86 {offsets = [0, 0], sizes = [2, 32], strides = [1, 1]} : vector<2x96xf32> to vector<2x32xf32>
    %88 = vector.extract_strided_slice %86 {offsets = [0, 32], sizes = [2, 32], strides = [1, 1]} : vector<2x96xf32> to vector<2x32xf32>
    %89 = vector.extract_strided_slice %86 {offsets = [0, 64], sizes = [2, 32], strides = [1, 1]} : vector<2x96xf32> to vector<2x32xf32>
    %90 = vector.extract_strided_slice %80 {offsets = [0, 96], sizes = [2, 32], strides = [1, 1]} : vector<2x128xf32> to vector<2x32xf32>
    %91 = math.tanh %90 : vector<2x32xf32>
    %92 = arith.mulf %88, %71 : vector<2x32xf32>
    %93 = arith.mulf %87, %91 : vector<2x32xf32>
    %94 = arith.addf %92, %93 : vector<2x32xf32>
    %95 = math.tanh %94 : vector<2x32xf32>
    %96 = arith.mulf %89, %95 : vector<2x32xf32>
    %97 = vector.extract_strided_slice %96 {offsets = [0, 0], sizes = [2, 16], strides = [1, 1]} : vector<2x32xf32> to vector<2x16xf32>
    %c6 = arith.constant 6 : index
    %c0_23 = arith.constant 0 : index
    %98 = vector.load %arg10[%c6, %c0_23] : memref<16x32xf32, #tpu.memory_space<vmem>>, vector<2x16xf32>
    tpu.vector_store %arg10[%c6, %c0_23], %97 {strides = array<i32>} : memref<16x32xf32, #tpu.memory_space<vmem>>, vector<2x16xf32>,
    %99 = vector.extract_strided_slice %96 {offsets = [0, 16], sizes = [2, 16], strides = [1, 1]} : vector<2x32xf32> to vector<2x16xf32>
    %c8 = arith.constant 8 : index
    %c16_24 = arith.constant 16 : index
    %100 = vector.load %arg10[%c8, %c16_24] : memref<16x32xf32, #tpu.memory_space<vmem>>, vector<2x16xf32>
    tpu.vector_store %arg10[%c8, %c16_24], %99 {strides = array<i32>} : memref<16x32xf32, #tpu.memory_space<vmem>>, vector<2x16xf32>,
    %101 = vector.extract_strided_slice %5 {offsets = [8, 0], sizes = [2, 128], strides = [1, 1]} : vector<16x128xf32> to vector<2x128xf32>
    %cst_25 = arith.constant dense<0.000000e+00> : vector<2x128xf32>
    %102 = tpu.matmul %96, %6, %cst_25 {dimension_numbers = #tpu.dot_dimension_numbers<[1], [0], [0], [1], [0, 0, 1, 1], [], []>} : vector<2x32xf32>, vector<32x128xf32>, vector<2x128xf32> -> vector<2x128xf32>
    %103 = arith.addf %101, %102 : vector<2x128xf32>
    %104 = vector.extract_strided_slice %103 {offsets = [0, 0], sizes = [2, 96], strides = [1, 1]} : vector<2x128xf32> to vector<2x96xf32>
    %105 = arith.negf %104 : vector<2x96xf32>
    %106 = math.exp %105 : vector<2x96xf32>
    %cst_26 = arith.constant 1.000000e+00 : f32
    %107 = vector.broadcast %cst_26 : f32 to vector<2x96xf32>
    %108 = arith.addf %107, %106 : vector<2x96xf32>
    %109 = arith.divf %107, %108 : vector<2x96xf32>
    %110 = vector.extract_strided_slice %109 {offsets = [0, 0], sizes = [2, 32], strides = [1, 1]} : vector<2x96xf32> to vector<2x32xf32>
    %111 = vector.extract_strided_slice %109 {offsets = [0, 32], sizes = [2, 32], strides = [1, 1]} : vector<2x96xf32> to vector<2x32xf32>
    %112 = vector.extract_strided_slice %109 {offsets = [0, 64], sizes = [2, 32], strides = [1, 1]} : vector<2x96xf32> to vector<2x32xf32>
    %113 = vector.extract_strided_slice %103 {offsets = [0, 96], sizes = [2, 32], strides = [1, 1]} : vector<2x128xf32> to vector<2x32xf32>
    %114 = math.tanh %113 : vector<2x32xf32>
    %115 = arith.mulf %111, %94 : vector<2x32xf32>
    %116 = arith.mulf %110, %114 : vector<2x32xf32>
    %117 = arith.addf %115, %116 : vector<2x32xf32>
    %118 = math.tanh %117 : vector<2x32xf32>
    %119 = arith.mulf %112, %118 : vector<2x32xf32>
    %120 = vector.extract_strided_slice %119 {offsets = [0, 0], sizes = [2, 16], strides = [1, 1]} : vector<2x32xf32> to vector<2x16xf32>
    %c8_27 = arith.constant 8 : index
    %c0_28 = arith.constant 0 : index
    %121 = vector.load %arg10[%c8_27, %c0_28] : memref<16x32xf32, #tpu.memory_space<vmem>>, vector<2x16xf32>
    tpu.vector_store %arg10[%c8_27, %c0_28], %120 {strides = array<i32>} : memref<16x32xf32, #tpu.memory_space<vmem>>, vector<2x16xf32>,
    %122 = vector.extract_strided_slice %119 {offsets = [0, 16], sizes = [2, 16], strides = [1, 1]} : vector<2x32xf32> to vector<2x16xf32>
    %c6_29 = arith.constant 6 : index
    %c16_30 = arith.constant 16 : index
    %123 = vector.load %arg10[%c6_29, %c16_30] : memref<16x32xf32, #tpu.memory_space<vmem>>, vector<2x16xf32>
    tpu.vector_store %arg10[%c6_29, %c16_30], %122 {strides = array<i32>} : memref<16x32xf32, #tpu.memory_space<vmem>>, vector<2x16xf32>,
    %124 = vector.extract_strided_slice %5 {offsets = [10, 0], sizes = [2, 128], strides = [1, 1]} : vector<16x128xf32> to vector<2x128xf32>
    %cst_31 = arith.constant dense<0.000000e+00> : vector<2x128xf32>
    %125 = tpu.matmul %119, %6, %cst_31 {dimension_numbers = #tpu.dot_dimension_numbers<[1], [0], [0], [1], [0, 0, 1, 1], [], []>} : vector<2x32xf32>, vector<32x128xf32>, vector<2x128xf32> -> vector<2x128xf32>
    %126 = arith.addf %124, %125 : vector<2x128xf32>
    %127 = vector.extract_strided_slice %126 {offsets = [0, 0], sizes = [2, 96], strides = [1, 1]} : vector<2x128xf32> to vector<2x96xf32>
    %128 = arith.negf %127 : vector<2x96xf32>
    %129 = math.exp %128 : vector<2x96xf32>
    %cst_32 = arith.constant 1.000000e+00 : f32
    %130 = vector.broadcast %cst_32 : f32 to vector<2x96xf32>
    %131 = arith.addf %130, %129 : vector<2x96xf32>
    %132 = arith.divf %130, %131 : vector<2x96xf32>
    %133 = vector.extract_strided_slice %132 {offsets = [0, 0], sizes = [2, 32], strides = [1, 1]} : vector<2x96xf32> to vector<2x32xf32>
    %134 = vector.extract_strided_slice %132 {offsets = [0, 32], sizes = [2, 32], strides = [1, 1]} : vector<2x96xf32> to vector<2x32xf32>
    %135 = vector.extract_strided_slice %132 {offsets = [0, 64], sizes = [2, 32], strides = [1, 1]} : vector<2x96xf32> to vector<2x32xf32>
    %136 = vector.extract_strided_slice %126 {offsets = [0, 96], sizes = [2, 32], strides = [1, 1]} : vector<2x128xf32> to vector<2x32xf32>
    %137 = math.tanh %136 : vector<2x32xf32>
    %138 = arith.mulf %134, %117 : vector<2x32xf32>
    %139 = arith.mulf %133, %137 : vector<2x32xf32>
    %140 = arith.addf %138, %139 : vector<2x32xf32>
    %141 = math.tanh %140 : vector<2x32xf32>
    %142 = arith.mulf %135, %141 : vector<2x32xf32>
    %143 = vector.extract_strided_slice %142 {offsets = [0, 0], sizes = [2, 16], strides = [1, 1]} : vector<2x32xf32> to vector<2x16xf32>
    %c10_33 = arith.constant 10 : index
    %c0_34 = arith.constant 0 : index
    %144 = vector.load %arg10[%c10_33, %c0_34] : memref<16x32xf32, #tpu.memory_space<vmem>>, vector<2x16xf32>
    tpu.vector_store %arg10[%c10_33, %c0_34], %143 {strides = array<i32>} : memref<16x32xf32, #tpu.memory_space<vmem>>, vector<2x16xf32>,
    %145 = vector.extract_strided_slice %142 {offsets = [0, 16], sizes = [2, 16], strides = [1, 1]} : vector<2x32xf32> to vector<2x16xf32>
    %c4_35 = arith.constant 4 : index
    %c16_36 = arith.constant 16 : index
    %146 = vector.load %arg10[%c4_35, %c16_36] : memref<16x32xf32, #tpu.memory_space<vmem>>, vector<2x16xf32>
    tpu.vector_store %arg10[%c4_35, %c16_36], %145 {strides = array<i32>} : memref<16x32xf32, #tpu.memory_space<vmem>>, vector<2x16xf32>,
    %147 = vector.extract_strided_slice %5 {offsets = [12, 0], sizes = [2, 128], strides = [1, 1]} : vector<16x128xf32> to vector<2x128xf32>
    %cst_37 = arith.constant dense<0.000000e+00> : vector<2x128xf32>
    %148 = tpu.matmul %142, %6, %cst_37 {dimension_numbers = #tpu.dot_dimension_numbers<[1], [0], [0], [1], [0, 0, 1, 1], [], []>} : vector<2x32xf32>, vector<32x128xf32>, vector<2x128xf32> -> vector<2x128xf32>
    %149 = arith.addf %147, %148 : vector<2x128xf32>
    %150 = vector.extract_strided_slice %149 {offsets = [0, 0], sizes = [2, 96], strides = [1, 1]} : vector<2x128xf32> to vector<2x96xf32>
    %151 = arith.negf %150 : vector<2x96xf32>
    %152 = math.exp %151 : vector<2x96xf32>
    %cst_38 = arith.constant 1.000000e+00 : f32
    %153 = vector.broadcast %cst_38 : f32 to vector<2x96xf32>
    %154 = arith.addf %153, %152 : vector<2x96xf32>
    %155 = arith.divf %153, %154 : vector<2x96xf32>
    %156 = vector.extract_strided_slice %155 {offsets = [0, 0], sizes = [2, 32], strides = [1, 1]} : vector<2x96xf32> to vector<2x32xf32>
    %157 = vector.extract_strided_slice %155 {offsets = [0, 32], sizes = [2, 32], strides = [1, 1]} : vector<2x96xf32> to vector<2x32xf32>
    %158 = vector.extract_strided_slice %155 {offsets = [0, 64], sizes = [2, 32], strides = [1, 1]} : vector<2x96xf32> to vector<2x32xf32>
    %159 = vector.extract_strided_slice %149 {offsets = [0, 96], sizes = [2, 32], strides = [1, 1]} : vector<2x128xf32> to vector<2x32xf32>
    %160 = math.tanh %159 : vector<2x32xf32>
    %161 = arith.mulf %157, %140 : vector<2x32xf32>
    %162 = arith.mulf %156, %160 : vector<2x32xf32>
    %163 = arith.addf %161, %162 : vector<2x32xf32>
    %164 = math.tanh %163 : vector<2x32xf32>
    %165 = arith.mulf %158, %164 : vector<2x32xf32>
    %166 = vector.extract_strided_slice %165 {offsets = [0, 0], sizes = [2, 16], strides = [1, 1]} : vector<2x32xf32> to vector<2x16xf32>
    %c12_39 = arith.constant 12 : index
    %c0_40 = arith.constant 0 : index
    %167 = vector.load %arg10[%c12_39, %c0_40] : memref<16x32xf32, #tpu.memory_space<vmem>>, vector<2x16xf32>
    tpu.vector_store %arg10[%c12_39, %c0_40], %166 {strides = array<i32>} : memref<16x32xf32, #tpu.memory_space<vmem>>, vector<2x16xf32>,
    %168 = vector.extract_strided_slice %165 {offsets = [0, 16], sizes = [2, 16], strides = [1, 1]} : vector<2x32xf32> to vector<2x16xf32>
    %c2_41 = arith.constant 2 : index
    %c16_42 = arith.constant 16 : index
    %169 = vector.load %arg10[%c2_41, %c16_42] : memref<16x32xf32, #tpu.memory_space<vmem>>, vector<2x16xf32>
    tpu.vector_store %arg10[%c2_41, %c16_42], %168 {strides = array<i32>} : memref<16x32xf32, #tpu.memory_space<vmem>>, vector<2x16xf32>,
    %170 = vector.extract_strided_slice %5 {offsets = [14, 0], sizes = [2, 128], strides = [1, 1]} : vector<16x128xf32> to vector<2x128xf32>
    %cst_43 = arith.constant dense<0.000000e+00> : vector<2x128xf32>
    %171 = tpu.matmul %165, %6, %cst_43 {dimension_numbers = #tpu.dot_dimension_numbers<[1], [0], [0], [1], [0, 0, 1, 1], [], []>} : vector<2x32xf32>, vector<32x128xf32>, vector<2x128xf32> -> vector<2x128xf32>
    %172 = arith.addf %170, %171 : vector<2x128xf32>
    %173 = vector.extract_strided_slice %172 {offsets = [0, 0], sizes = [2, 96], strides = [1, 1]} : vector<2x128xf32> to vector<2x96xf32>
    %174 = arith.negf %173 : vector<2x96xf32>
    %175 = math.exp %174 : vector<2x96xf32>
    %cst_44 = arith.constant 1.000000e+00 : f32
    %176 = vector.broadcast %cst_44 : f32 to vector<2x96xf32>
    %177 = arith.addf %176, %175 : vector<2x96xf32>
    %178 = arith.divf %176, %177 : vector<2x96xf32>
    %179 = vector.extract_strided_slice %178 {offsets = [0, 0], sizes = [2, 32], strides = [1, 1]} : vector<2x96xf32> to vector<2x32xf32>
    %180 = vector.extract_strided_slice %178 {offsets = [0, 32], sizes = [2, 32], strides = [1, 1]} : vector<2x96xf32> to vector<2x32xf32>
    %181 = vector.extract_strided_slice %178 {offsets = [0, 64], sizes = [2, 32], strides = [1, 1]} : vector<2x96xf32> to vector<2x32xf32>
    %182 = vector.extract_strided_slice %172 {offsets = [0, 96], sizes = [2, 32], strides = [1, 1]} : vector<2x128xf32> to vector<2x32xf32>
    %183 = math.tanh %182 : vector<2x32xf32>
    %184 = arith.mulf %180, %163 : vector<2x32xf32>
    %185 = arith.mulf %179, %183 : vector<2x32xf32>
    %186 = arith.addf %184, %185 : vector<2x32xf32>
    %187 = math.tanh %186 : vector<2x32xf32>
    %188 = arith.mulf %181, %187 : vector<2x32xf32>
    %189 = vector.extract_strided_slice %188 {offsets = [0, 0], sizes = [2, 16], strides = [1, 1]} : vector<2x32xf32> to vector<2x16xf32>
    %c14_45 = arith.constant 14 : index
    %c0_46 = arith.constant 0 : index
    %190 = vector.load %arg10[%c14_45, %c0_46] : memref<16x32xf32, #tpu.memory_space<vmem>>, vector<2x16xf32>
    tpu.vector_store %arg10[%c14_45, %c0_46], %189 {strides = array<i32>} : memref<16x32xf32, #tpu.memory_space<vmem>>, vector<2x16xf32>,
    %191 = vector.extract_strided_slice %188 {offsets = [0, 16], sizes = [2, 16], strides = [1, 1]} : vector<2x32xf32> to vector<2x16xf32>
    %c0_47 = arith.constant 0 : index
    %c16_48 = arith.constant 16 : index
    %192 = vector.load %arg10[%c0_47, %c16_48] : memref<16x32xf32, #tpu.memory_space<vmem>>, vector<2x16xf32>
    tpu.vector_store %arg10[%c0_47, %c16_48], %191 {strides = array<i32>} : memref<16x32xf32, #tpu.memory_space<vmem>>, vector<2x16xf32>,
    %c0_49 = arith.constant 0 : index
    %c0_50 = arith.constant 0 : index
    %193 = vector.load %arg10[%c0_49, %c0_50] : memref<16x32xf32, #tpu.memory_space<vmem>>, vector<16x32xf32>
    %c0_51 = arith.constant 0 : index
    %c0_52 = arith.constant 0 : index
    %194 = vector.load %arg5[%c0_51, %c0_52] : memref<32x256xf32, #tpu.memory_space<vmem>>, vector<32x256xf32>
    %cst_53 = arith.constant dense<0.000000e+00> : vector<16x256xf32>
    %195 = tpu.matmul %193, %194, %cst_53 {dimension_numbers = #tpu.dot_dimension_numbers<[1], [0], [0], [1], [0, 0, 1, 1], [], []>} : vector<16x32xf32>, vector<32x256xf32>, vector<16x256xf32> -> vector<16x256xf32>
    %c0_54 = arith.constant 0 : index
    %c0_55 = arith.constant 0 : index
    %196 = vector.load %arg6[%c0_54, %c0_55] : memref<1x256xf32, #tpu.memory_space<vmem>>, vector<1x256xf32>
    %197 = vector.broadcast %196 : vector<1x256xf32> to vector<16x256xf32>
    %198 = arith.addf %195, %197 : vector<16x256xf32>
    %cst_56 = arith.constant 0.000000e+00 : f32
    %199 = vector.broadcast %cst_56 : f32 to vector<16x256xf32>
    %200 = arith.maximumf %198, %199 : vector<16x256xf32>
    %201 = vector.extract_strided_slice %200 {offsets = [0, 0], sizes = [16, 128], strides = [1, 1]} : vector<16x256xf32> to vector<16x128xf32>
    %202 = vector.extract_strided_slice %200 {offsets = [0, 128], sizes = [16, 128], strides = [1, 1]} : vector<16x256xf32> to vector<16x128xf32>
    %c0_57 = arith.constant 0 : index
    %c0_58 = arith.constant 0 : index
    %203 = vector.load %arg0[%c0_57, %c0_58] : memref<16x1xi32, #tpu.memory_space<vmem>>, vector<16x1xi32>
    %204 = tpu.iota {dimensions = array<i32: 1>} : vector<16x16xi32>
    %205 = vector.broadcast %203 : vector<16x1xi32> to vector<16x16xi32>
    %206 = arith.cmpi eq, %204, %205 : vector<16x16xi32>
    %207 = arith.extui %206 : vector<16x16xi1> to vector<16x16xi32>
    %208 = arith.sitofp %207 : vector<16x16xi32> to vector<16x16xf32>
    %cst_59 = arith.constant dense<0.000000e+00> : vector<16x128xf32>
    %209 = tpu.matmul %208, %202, %cst_59 {dimension_numbers = #tpu.dot_dimension_numbers<[1], [0], [0], [1], [0, 0, 1, 1], [], []>} : vector<16x16xf32>, vector<16x128xf32>, vector<16x128xf32> -> vector<16x128xf32>
    %c0_60 = arith.constant 0 : index
    %c0_61 = arith.constant 0 : index
    %210 = vector.load %arg7[%c0_60, %c0_61] : memref<128x1024xf32, #tpu.memory_space<vmem>>, vector<128x1024xf32>
    %cst_62 = arith.constant dense<0.000000e+00> : vector<16x1024xf32>
    %211 = tpu.matmul %209, %210, %cst_62 {dimension_numbers = #tpu.dot_dimension_numbers<[1], [0], [0], [1], [0, 0, 1, 1], [], []>} : vector<16x128xf32>, vector<128x1024xf32>, vector<16x1024xf32> -> vector<16x1024xf32>
    %212 = tpu.concatenate %201, %201, %201, %201, %201, %201, %201, %201 in 1 : vector<16x128xf32>, vector<16x128xf32>, vector<16x128xf32>, vector<16x128xf32>, vector<16x128xf32>, vector<16x128xf32>, vector<16x128xf32>, vector<16x128xf32> -> vector<16x1024xf32>
    %213 = arith.mulf %211, %212 : vector<16x1024xf32>
    %c0_63 = arith.constant 0 : index
    %c0_64 = arith.constant 0 : index
    %214 = vector.load %arg8[%c0_63, %c0_64] : memref<1024x8xf32, #tpu.memory_space<vmem>>, vector<1024x8xf32>
    %cst_65 = arith.constant dense<0.000000e+00> : vector<16x8xf32>
    %215 = tpu.matmul %213, %214, %cst_65 {dimension_numbers = #tpu.dot_dimension_numbers<[1], [0], [0], [1], [0, 0, 1, 1], [], []>} : vector<16x1024xf32>, vector<1024x8xf32>, vector<16x8xf32> -> vector<16x8xf32>
    %c0_66 = arith.constant 0 : index
    %c0_67 = arith.constant 0 : index
    %216 = vector.load %arg9[%c0_66, %c0_67] : memref<16x8xf32, #tpu.memory_space<vmem>>, vector<16x8xf32>
    tpu.vector_store %arg9[%c0_66, %c0_67], %215 {strides = array<i32>} : memref<16x8xf32, #tpu.memory_space<vmem>>, vector<16x8xf32>,
    return
  }
}

</mosaic_0001>

<llo_original>
// kernel: edge_labeller_forward.1
$region0: #{edge_labeller_forward.1}
  #allocation0 [shape = 'u32[]', space=smem, size = 0x4, offset = 0x4, fixed_abs, tag = 'smem constant byte address 0x4 - core index']
  #allocation1 [shape = 'u32[144,128]{1,0:T(1,128)}', space=vmem, size = 0x12000, scoped, tag = 'internal scratch']
  #allocation2 [shape = 'f32[16,32]{1,0:T(8,128)}', space=vmem, size = 0x2000, scoped, tag = 'scratch operand']
  %s0 = inlined_call_operand.vmem [shape: s32[16,1], index: 0, kind: input, shape index: {}]
  %s1 = inlined_call_operand.vmem [shape: f32[16,48], index: 1, kind: input, shape index: {}]
  %s2 = inlined_call_operand.vmem [shape: f32[48,128], index: 2, kind: input, shape index: {}]
  %s3 = inlined_call_operand.vmem [shape: f32[1,128], index: 3, kind: input, shape index: {}]
  %s4 = inlined_call_operand.vmem [shape: f32[32,128], index: 4, kind: input, shape index: {}]
  %s5 = inlined_call_operand.vmem [shape: f32[32,256], index: 5, kind: input, shape index: {}]
  %s6 = inlined_call_operand.vmem [shape: f32[1,256], index: 6, kind: input, shape index: {}]
  %s7 = inlined_call_operand.vmem [shape: f32[128,1024], index: 7, kind: input, shape index: {}]
  %s8 = inlined_call_operand.vmem [shape: f32[1024,8], index: 8, kind: input, shape index: {}]
  %s9 = inlined_call_operand.vmem [shape: f32[16,8], index: 9, kind: output, shape index: {}]
  %s10 = sld [smem:[#allocation0]]
  $region46: #{edge_labeller_forward.1} parent=0
    _
  %s12 = ssub.s32 1, %s10
  %s13 = scalar_select 0, %s12, %s10
  // Predicated region
  $region2: #{edge_labeller_forward.1} parent=0 // pred_check
    _
  $region3: #{edge_labeller_forward.1} parent=0 // pred_check_branch
    %15 = sbr.rel (0) target = $region5
  $region4: #{edge_labeller_forward.1} parent=0 // pred_region
    _
  $region5: #{edge_labeller_forward.1} parent=0 // pred_fallthru
    _
  // Predicated region
  $region6: #{edge_labeller_forward.1} parent=0 // pred_check
    _
  $region7: #{edge_labeller_forward.1} parent=0 // pred_check_branch
    %17 = sbr.rel (0) target = $region9
  $region8: #{edge_labeller_forward.1} parent=0 // pred_region
    _
  $region9: #{edge_labeller_forward.1} parent=0 // pred_fallthru
    _
  // Predicated region
  $region10: #{edge_labeller_forward.1} parent=0 // pred_check
    _
  $region11: #{edge_labeller_forward.1} parent=0 // pred_check_branch
    %19 = sbr.rel (0) target = $region13
  $region12: #{edge_labeller_forward.1} parent=0 // pred_region
    _
  $region13: #{edge_labeller_forward.1} parent=0 // pred_fallthru
    _
  // Predicated region
  $region14: #{edge_labeller_forward.1} parent=0 // pred_check
    _
  $region15: #{edge_labeller_forward.1} parent=0 // pred_check_branch
    %21 = sbr.rel (0) target = $region17
  $region16: #{edge_labeller_forward.1} parent=0 // pred_region
    _
  $region17: #{edge_labeller_forward.1} parent=0 // pred_fallthru
    _
  // Predicated region
  $region18: #{edge_labeller_forward.1} parent=0 // pred_check
    _
  $region19: #{edge_labeller_forward.1} parent=0 // pred_check_branch
    %23 = sbr.rel (0) target = $region21
  $region20: #{edge_labeller_forward.1} parent=0 // pred_region
    _
  $region21: #{edge_labeller_forward.1} parent=0 // pred_fallthru
    _
  // Predicated region
  $region22: #{edge_labeller_forward.1} parent=0 // pred_check
    _
  $region23: #{edge_labeller_forward.1} parent=0 // pred_check_branch
    %25 = sbr.rel (0) target = $region25
  $region24: #{edge_labeller_forward.1} parent=0 // pred_region
    _
  $region25: #{edge_labeller_forward.1} parent=0 // pred_fallthru
    _
  // Predicated region
  $region26: #{edge_labeller_forward.1} parent=0 // pred_check
    _
  $region27: #{edge_labeller_forward.1} parent=0 // pred_check_branch
    %27 = sbr.rel (0) target = $region29
  $region28: #{edge_labeller_forward.1} parent=0 // pred_region
    _
  $region29: #{edge_labeller_forward.1} parent=0 // pred_fallthru
    _
  // Predicated region
  $region30: #{edge_labeller_forward.1} parent=0 // pred_check
    _
  $region31: #{edge_labeller_forward.1} parent=0 // pred_check_branch
    %29 = sbr.rel (0) target = $region33
  $region32: #{edge_labeller_forward.1} parent=0 // pred_region
    _
  $region33: #{edge_labeller_forward.1} parent=0 // pred_fallthru
    _
  // Predicated region
  $region34: #{edge_labeller_forward.1} parent=0 // pred_check
    _
  $region35: #{edge_labeller_forward.1} parent=0 // pred_check_branch
    %31 = sbr.rel (0) target = $region37
  $region36: #{edge_labeller_forward.1} parent=0 // pred_region
    _
  $region37: #{edge_labeller_forward.1} parent=0 // pred_fallthru
    _
  %v32 = vld [vmem:[%s1] sm:$0xff]
  %v33 = vld [vmem:[%s1 + $0x8] sm:$0xff]
  %v34 = vld [vmem:[%s2] sm:$0xff]
  %v35 = vld [vmem:[%s2 + $0x8] sm:$0xff]
  %v36 = vld [vmem:[%s2 + $0x10] sm:$0xff]
  %v37 = vld [vmem:[%s2 + $0x18] sm:$0xff]
  %v38 = vld [vmem:[%s2 + $0x20] sm:$0xff]
  %v39 = vld [vmem:[%s2 + $0x28] sm:$0xff]
  %v40 = vld [vmem:[%s3] sm:$0x1]
  %v42 = vlaneseq
  %v43 = vshrl.u32 %v42, 7
  %v44 = vsub.s32 0, %v43
  %v45 = vrot.slane %v40, %v44
  %vm47 = vcmask 392192
  %v49 = vsel %vm47, %v32, 0
  %v52 = vsel %vm47, %v33, 0
  %54 = vmatprep.subr.mxu0 0.0
  %55 = vmatpush1.msra.mxu0 %v34
  %56 = vmatprep.subr.mxu0 0.0
  %57 = vmatpush1.msra.mxu0 %v35
  %58 = vmatprep.subr.mxu0 0.0
  %59 = vmatpush1.msra.mxu0 %v36
  %60 = vmatprep.subr.mxu0 0.0
  %61 = vmatpush1.msra.mxu0 %v37
  %62 = vmatprep.subr.mxu0 0.0
  %63 = vmatpush1.msra.mxu0 %v38
  %64 = vmatprep.subr.mxu0 0.0
  %65 = vmatpush1.msra.mxu0 %v39
  %66 = vmatprep.subr.mxu0 0.0
  %67 = vmatpush1.msra.mxu0 0.0
  %68 = vmatprep.subr.mxu0 0.0
  %69 = vmatpush1.msra.mxu0 0.0
  %70 = vmatprep.subr.mxu0 0.0
  %71 = vmatpush1.msra.mxu0 0.0
  %72 = vmatprep.subr.mxu0 0.0
  %73 = vmatpush1.msra.mxu0 0.0
  %74 = vmatprep.subr.mxu0 0.0
  %75 = vmatpush1.msra.mxu0 0.0
  %76 = vmatprep.subr.mxu0 0.0
  %77 = vmatpush1.msra.mxu0 0.0
  %78 = vmatprep.subr.mxu0 0.0
  %79 = vmatpush1.msra.mxu0 0.0
  %80 = vmatprep.subr.mxu0 0.0
  %81 = vmatpush1.msra.mxu0 0.0
  %82 = vmatprep.subr.mxu0 0.0
  %83 = vmatpush1.msra.mxu0 0.0
  %84 = vmatprep.subr.mxu0 0.0
  %85 = vmatpush1.msra.mxu0 0.0
  %86 = vmatprep.subr.mxu0 0.0
  %87 = vmatpush1.msra.mxu0 0.0
  %88 = vmatprep.subr.mxu0 0.0
  %89 = vmatpush1.msra.mxu0 0.0
  %90 = vmatprep.subr.mxu0 0.0
  %91 = vmatpush1.msra.mxu0 0.0
  %92 = vmatprep.subr.mxu0 0.0
  %93 = vmatpush1.msra.mxu0 0.0
  %94 = vmatprep.subr.mxu0 0.0
  %95 = vmatpush1.msra.mxu0 0.0
  %96 = vmatprep.subr.mxu0 0.0
  %97 = vmatpush1.msra.mxu0 0.0
  %98 = vmatprep.subr.mxu0 0.0
  %99 = vmatpush1.msra.mxu0 0.0
  %100 = vmatprep.subr.mxu0 0.0
  %101 = vmatpush1.msra.mxu0 0.0
  %102 = vmatprep.subr.mxu0 0.0
  %103 = vmatpush1.msra.mxu0 0.0
  %104 = vmatprep.subr.mxu0 0.0
  %105 = vmatpush1.msra.mxu0 0.0
  %106 = vmatprep.subr.mxu0 0.0
  %107 = vmatpush1.msra.mxu0 0.0
  %108 = vmatprep.subr.mxu0 0.0
  %109 = vmatpush1.msra.mxu0 0.0
  %110 = vmatprep.subr.mxu0 0.0
  %111 = vmatpush1.msra.mxu0 0.0
  %112 = vmatprep.subr.mxu0 0.0
  %113 = vmatpush1.msra.mxu0 0.0
  %114 = vmatprep.subr.mxu0 0.0
  %115 = vmatpush1.msra.mxu0 0.0
  %116 = vmatprep.subr.mxu0 0.0
  %117 = vmatpush1.msra.mxu0 0.0
  %118 = vmatprep.mubr.f32.mxu0 0.0
  %119 = vmatmul.mubr.f32.gmra.mrb[0].mxu0 %v49
  %v120 = vpop.f32.mrb[0].mxu0
  %v121 = vadd.f32 %v45, %v120
  %v122 = vpop.f32.mrb[0].mxu0
  %123 = vmatprep.mubr.f32.mxu0 0.0
  %124 = vmatmul.mubr.f32.gmra.mrb[0].mxu0 %v52
  %v125 = vpop.f32.mrb[0].mxu0
  %v126 = vadd.f32 %v45, %v125
  %v127 = vpop.f32.mrb[0].mxu0
  %128 = vdwg.mxu0
  %v129 = vld [vmem:[%s4] sm:$0xff]
  %v130 = vld [vmem:[%s4 + $0x8] sm:$0xff]
  %v131 = vld [vmem:[%s4 + $0x10] sm:$0xff]
  %v132 = vld [vmem:[%s4 + $0x18] sm:$0xff]
  %vm133 = vcmask 261120
  %v135 = vsel %vm133, 0.0, 0
  %137 = vmatprep.subr.mxu0 0.0
  %138 = vmatpush1.msra.mxu0 %v129
  %139 = vmatprep.subr.mxu0 0.0
  %140 = vmatpush1.msra.mxu0 %v130
  %141 = vmatprep.subr.mxu0 0.0
  %142 = vmatpush1.msra.mxu0 %v131
  %143 = vmatprep.subr.mxu0 0.0
  %144 = vmatpush1.msra.mxu0 %v132
  %145 = vmatprep.subr.mxu0 0.0
  %146 = vmatpush1.msra.mxu0 0.0
  %147 = vmatprep.subr.mxu0 0.0
  %148 = vmatpush1.msra.mxu0 0.0
  %149 = vmatprep.subr.mxu0 0.0
  %150 = vmatpush1.msra.mxu0 0.0
  %151 = vmatprep.subr.mxu0 0.0
  %152 = vmatpush1.msra.mxu0 0.0
  %153 = vmatprep.subr.mxu0 0.0
  %154 = vmatpush1.msra.mxu0 0.0
  %155 = vmatprep.subr.mxu0 0.0
  %156 = vmatpush1.msra.mxu0 0.0
  %157 = vmatprep.subr.mxu0 0.0
  %158 = vmatpush1.msra.mxu0 0.0
  %159 = vmatprep.subr.mxu0 0.0
  %160 = vmatpush1.msra.mxu0 0.0
  %161 = vmatprep.subr.mxu0 0.0
  %162 = vmatpush1.msra.mxu0 0.0
  %163 = vmatprep.subr.mxu0 0.0
  %164 = vmatpush1.msra.mxu0 0.0
  %165 = vmatprep.subr.mxu0 0.0
  %166 = vmatpush1.msra.mxu0 0.0
  %167 = vmatprep.subr.mxu0 0.0
  %168 = vmatpush1.msra.mxu0 0.0
  %169 = vmatprep.subr.mxu0 0.0
  %170 = vmatpush1.msra.mxu0 0.0
  %171 = vmatprep.subr.mxu0 0.0
  %172 = vmatpush1.msra.mxu0 0.0
  %173 = vmatprep.subr.mxu0 0.0
  %174 = vmatpush1.msra.mxu0 0.0
  %175 = vmatprep.subr.mxu0 0.0
  %176 = vmatpush1.msra.mxu0 0.0
  %177 = vmatprep.subr.mxu0 0.0
  %178 = vmatpush1.msra.mxu0 0.0
  %179 = vmatprep.subr.mxu0 0.0
  %180 = vmatpush1.msra.mxu0 0.0
  %181 = vmatprep.subr.mxu0 0.0
  %182 = vmatpush1.msra.mxu0 0.0
  %183 = vmatprep.subr.mxu0 0.0
  %184 = vmatpush1.msra.mxu0 0.0
  %185 = vmatprep.subr.mxu0 0.0
  %186 = vmatpush1.msra.mxu0 0.0
  %187 = vmatprep.subr.mxu0 0.0
  %188 = vmatpush1.msra.mxu0 0.0
  %189 = vmatprep.subr.mxu0 0.0
  %190 = vmatpush1.msra.mxu0 0.0
  %191 = vmatprep.subr.mxu0 0.0
  %192 = vmatpush1.msra.mxu0 0.0
  %193 = vmatprep.subr.mxu0 0.0
  %194 = vmatpush1.msra.mxu0 0.0
  %195 = vmatprep.subr.mxu0 0.0
  %196 = vmatpush1.msra.mxu0 0.0
  %197 = vmatprep.subr.mxu0 0.0
  %198 = vmatpush1.msra.mxu0 0.0
  %199 = vmatprep.subr.mxu0 0.0
  %200 = vmatpush1.msra.mxu0 0.0
  %201 = vmatprep.mubr.f32.mxu0 0.0
  %202 = vmatmul.mubr.f32.gmra.mrb[0].mxu0 %v135
  %v203 = vpop.f32.mrb[0].mxu0
  %v204 = vadd.f32 0.0, %v203
  %v205 = vpop.f32.mrb[0].mxu0
  %206 = vdwg.mxu0
  %v207 = vadd.f32 %v121, %v204
  %v208 = vxor.u32 %v207, 2147483648
  %v209 = vmul.f32 %v208, 1.442695
  %v210 = vpow.pop %v209
  %v211 = vadd.f32 %v210, 1.0
  %v212 = vrcp.pop %v211
  %v213 = vmul.f32 1.0, %v212
  %v214 = vtanh.pop %v207
  %v215 = vmul.f32 %v213, 0.0
  %217 = vrot.lane.b32.xlu0 %v214, 32
  %v218 = vpop.permute.xlu0 %217
  %v220 = vmul.f32 %v213, %v218
  %222 = vrot.lane.b32.xlu0 %v220, 32
  %v223 = vpop.permute.xlu0 %222
  %v225 = vadd.f32 %v215, %v223
  %v226 = vtanh.pop %v225
  %228 = vrot.lane.b32.xlu0 %v226, 32
  %v229 = vpop.permute.xlu0 %228
  %v231 = vmul.f32 %v213, %v229
  %233 = vrot.lane.b32.xlu0 %v231, 64
  %v234 = vpop.permute.xlu0 %233
  %vm236 = vcmask 123904
  %237 = vst.msk [vmem:[#allocation2] sm:$0x3] %vm236, %v234
  %vm238 = vcmask 255104
  %239 = vst.msk [vmem:[#allocation2 + $0xe] sm:$0x3] %vm238, %v234
  %v240 = vsel %vm133, %v234, 0
  %242 = vmatprep.subr.mxu0 0.0
  %243 = vmatpush1.msra.mxu0 %v129
  %244 = vmatprep.subr.mxu0 0.0
  %245 = vmatpush1.msra.mxu0 %v130
  %246 = vmatprep.subr.mxu0 0.0
  %247 = vmatpush1.msra.mxu0 %v131
  %248 = vmatprep.subr.mxu0 0.0
  %249 = vmatpush1.msra.mxu0 %v132
  %250 = vmatprep.subr.mxu0 0.0
  %251 = vmatpush1.msra.mxu0 0.0
  %252 = vmatprep.subr.mxu0 0.0
  %253 = vmatpush1.msra.mxu0 0.0
  %254 = vmatprep.subr.mxu0 0.0
  %255 = vmatpush1.msra.mxu0 0.0
  %256 = vmatprep.subr.mxu0 0.0
  %257 = vmatpush1.msra.mxu0 0.0
  %258 = vmatprep.subr.mxu0 0.0
  %259 = vmatpush1.msra.mxu0 0.0
  %260 = vmatprep.subr.mxu0 0.0
  %261 = vmatpush1.msra.mxu0 0.0
  %262 = vmatprep.subr.mxu0 0.0
  %263 = vmatpush1.msra.mxu0 0.0
  %264 = vmatprep.subr.mxu0 0.0
  %265 = vmatpush1.msra.mxu0 0.0
  %266 = vmatprep.subr.mxu0 0.0
  %267 = vmatpush1.msra.mxu0 0.0
  %268 = vmatprep.subr.mxu0 0.0
  %269 = vmatpush1.msra.mxu0 0.0
  %270 = vmatprep.subr.mxu0 0.0
  %271 = vmatpush1.msra.mxu0 0.0
  %272 = vmatprep.subr.mxu0 0.0
  %273 = vmatpush1.msra.mxu0 0.0
  %274 = vmatprep.subr.mxu0 0.0
  %275 = vmatpush1.msra.mxu0 0.0
  %276 = vmatprep.subr.mxu0 0.0
  %277 = vmatpush1.msra.mxu0 0.0
  %278 = vmatprep.subr.mxu0 0.0
  %279 = vmatpush1.msra.mxu0 0.0
  %280 = vmatprep.subr.mxu0 0.0
  %281 = vmatpush1.msra.mxu0 0.0
  %282 = vmatprep.subr.mxu0 0.0
  %283 = vmatpush1.msra.mxu0 0.0
  %284 = vmatprep.subr.mxu0 0.0
  %285 = vmatpush1.msra.mxu0 0.0
  %286 = vmatprep.subr.mxu0 0.0
  %287 = vmatpush1.msra.mxu0 0.0
  %288 = vmatprep.subr.mxu0 0.0
  %289 = vmatpush1.msra.mxu0 0.0
  %290 = vmatprep.subr.mxu0 0.0
  %291 = vmatpush1.msra.mxu0 0.0
  %292 = vmatprep.subr.mxu0 0.0
  %293 = vmatpush1.msra.mxu0 0.0
  %294 = vmatprep.subr.mxu0 0.0
  %295 = vmatpush1.msra.mxu0 0.0
  %296 = vmatprep.subr.mxu0 0.0
  %297 = vmatpush1.msra.mxu0 0.0
  %298 = vmatprep.subr.mxu0 0.0
  %299 = vmatpush1.msra.mxu0 0.0
  %300 = vmatprep.subr.mxu0 0.0
  %301 = vmatpush1.msra.mxu0 0.0
  %302 = vmatprep.subr.mxu0 0.0
  %303 = vmatpush1.msra.mxu0 0.0
  %304 = vmatprep.subr.mxu0 0.0
  %305 = vmatpush1.msra.mxu0 0.0
  %306 = vmatprep.mubr.f32.mxu0 0.0
  %307 = vmatmul.mubr.f32.gmra.mrb[0].mxu0 %v240
  %v308 = vpop.f32.mrb[0].mxu0
  %v309 = vadd.f32 0.0, %v308
  %v310 = vpop.f32.mrb[0].mxu0
  %311 = vdwg.mxu0
  %v313 = vrot.slane %v309, 6
  %v315 = vadd.f32 %v121, %v313
  %v316 = vxor.u32 %v315, 2147483648
  %v317 = vmul.f32 %v316, 1.442695
  %v318 = vpow.pop %v317
  %v319 = vadd.f32 %v318, 1.0
  %v320 = vrcp.pop %v319
  %v321 = vmul.f32 1.0, %v320
  %v322 = vtanh.pop %v315
  %v324 = vrot.slane %v225, 6
  %v326 = vmul.f32 %v321, %v324
  %328 = vrot.lane.b32.xlu0 %v322, 32
  %v329 = vpop.permute.xlu0 %328
  %v331 = vmul.f32 %v321, %v329
  %333 = vrot.lane.b32.xlu0 %v331, 32
  %v334 = vpop.permute.xlu0 %333
  %v336 = vadd.f32 %v326, %v334
  %v337 = vtanh.pop %v336
  %339 = vrot.lane.b32.xlu0 %v337, 32
  %v340 = vpop.permute.xlu0 %339
  %v342 = vmul.f32 %v321, %v340
  %344 = vrot.lane.b32.xlu0 %v342, 64
  %v345 = vpop.permute.xlu0 %344
  %vm347 = vcmask 125954
  %348 = vst.msk [vmem:[#allocation2] sm:$0xc] %vm347, %v345
  %vm349 = vcmask 257154
  %350 = vst.msk [vmem:[#allocation2 + $0xa] sm:$0xc] %vm349, %v345
  %v351 = vrot.slane %v342, 2
  %352 = vrot.lane.b32.xlu0 %v351, 64
  %v353 = vpop.permute.xlu0 %352
  %v354 = vsel %vm133, %v353, 0
  %356 = vmatprep.subr.mxu0 0.0
  %357 = vmatpush1.msra.mxu0 %v129
  %358 = vmatprep.subr.mxu0 0.0
  %359 = vmatpush1.msra.mxu0 %v130
  %360 = vmatprep.subr.mxu0 0.0
  %361 = vmatpush1.msra.mxu0 %v131
  %362 = vmatprep.subr.mxu0 0.0
  %363 = vmatpush1.msra.mxu0 %v132
  %364 = vmatprep.subr.mxu0 0.0
  %365 = vmatpush1.msra.mxu0 0.0
  %366 = vmatprep.subr.mxu0 0.0
  %367 = vmatpush1.msra.mxu0 0.0
  %368 = vmatprep.subr.mxu0 0.0
  %369 = vmatpush1.msra.mxu0 0.0
  %370 = vmatprep.subr.mxu0 0.0
  %371 = vmatpush1.msra.mxu0 0.0
  %372 = vmatprep.subr.mxu0 0.0
  %373 = vmatpush1.msra.mxu0 0.0
  %374 = vmatprep.subr.mxu0 0.0
  %375 = vmatpush1.msra.mxu0 0.0
  %376 = vmatprep.subr.mxu0 0.0
  %377 = vmatpush1.msra.mxu0 0.0
  %378 = vmatprep.subr.mxu0 0.0
  %379 = vmatpush1.msra.mxu0 0.0
  %380 = vmatprep.subr.mxu0 0.0
  %381 = vmatpush1.msra.mxu0 0.0
  %382 = vmatprep.subr.mxu0 0.0
  %383 = vmatpush1.msra.mxu0 0.0
  %384 = vmatprep.subr.mxu0 0.0
  %385 = vmatpush1.msra.mxu0 0.0
  %386 = vmatprep.subr.mxu0 0.0
  %387 = vmatpush1.msra.mxu0 0.0
  %388 = vmatprep.subr.mxu0 0.0
  %389 = vmatpush1.msra.mxu0 0.0
  %390 = vmatprep.subr.mxu0 0.0
  %391 = vmatpush1.msra.mxu0 0.0
  %392 = vmatprep.subr.mxu0 0.0
  %393 = vmatpush1.msra.mxu0 0.0
  %394 = vmatprep.subr.mxu0 0.0
  %395 = vmatpush1.msra.mxu0 0.0
  %396 = vmatprep.subr.mxu0 0.0
  %397 = vmatpush1.msra.mxu0 0.0
  %398 = vmatprep.subr.mxu0 0.0
  %399 = vmatpush1.msra.mxu0 0.0
  %400 = vmatprep.subr.mxu0 0.0
  %401 = vmatpush1.msra.mxu0 0.0
  %402 = vmatprep.subr.mxu0 0.0
  %403 = vmatpush1.msra.mxu0 0.0
  %404 = vmatprep.subr.mxu0 0.0
  %405 = vmatpush1.msra.mxu0 0.0
  %406 = vmatprep.subr.mxu0 0.0
  %407 = vmatpush1.msra.mxu0 0.0
  %408 = vmatprep.subr.mxu0 0.0
  %409 = vmatpush1.msra.mxu0 0.0
  %410 = vmatprep.subr.mxu0 0.0
  %411 = vmatpush1.msra.mxu0 0.0
  %412 = vmatprep.subr.mxu0 0.0
  %413 = vmatpush1.msra.mxu0 0.0
  %414 = vmatprep.subr.mxu0 0.0
  %415 = vmatpush1.msra.mxu0 0.0
  %416 = vmatprep.subr.mxu0 0.0
  %417 = vmatpush1.msra.mxu0 0.0
  %418 = vmatprep.subr.mxu0 0.0
  %419 = vmatpush1.msra.mxu0 0.0
  %420 = vmatprep.mubr.f32.mxu0 0.0
  %421 = vmatmul.mubr.f32.gmra.mrb[0].mxu0 %v354
  %v422 = vpop.f32.mrb[0].mxu0
  %v423 = vadd.f32 0.0, %v422
  %v424 = vpop.f32.mrb[0].mxu0
  %425 = vdwg.mxu0
  %v427 = vrot.slane %v423, 4
  %v429 = vadd.f32 %v121, %v427
  %v430 = vxor.u32 %v429, 2147483648
  %v431 = vmul.f32 %v430, 1.442695
  %v432 = vpow.pop %v431
  %v433 = vadd.f32 %v432, 1.0
  %v434 = vrcp.pop %v433
  %v435 = vmul.f32 1.0, %v434
  %v436 = vtanh.pop %v429
  %v438 = vrot.slane %v336, 6
  %v440 = vmul.f32 %v435, %v438
  %442 = vrot.lane.b32.xlu0 %v436, 32
  %v443 = vpop.permute.xlu0 %442
  %v445 = vmul.f32 %v435, %v443
  %447 = vrot.lane.b32.xlu0 %v445, 32
  %v448 = vpop.permute.xlu0 %447
  %v450 = vadd.f32 %v440, %v448
  %v451 = vtanh.pop %v450
  %453 = vrot.lane.b32.xlu0 %v451, 32
  %v454 = vpop.permute.xlu0 %453
  %v456 = vmul.f32 %v435, %v454
  %458 = vrot.lane.b32.xlu0 %v456, 64
  %v459 = vpop.permute.xlu0 %458
  %vm461 = vcmask 128004
  %462 = vst.msk [vmem:[#allocation2] sm:$0x30] %vm461, %v459
  %vm463 = vcmask 259204
  %464 = vst.msk [vmem:[#allocation2 + $0x6] sm:$0x30] %vm463, %v459
  %v465 = vrot.slane %v456, 4
  %466 = vrot.lane.b32.xlu0 %v465, 64
  %v467 = vpop.permute.xlu0 %466
  %v468 = vsel %vm133, %v467, 0
  %470 = vmatprep.subr.mxu0 0.0
  %471 = vmatpush1.msra.mxu0 %v129
  %472 = vmatprep.subr.mxu0 0.0
  %473 = vmatpush1.msra.mxu0 %v130
  %474 = vmatprep.subr.mxu0 0.0
  %475 = vmatpush1.msra.mxu0 %v131
  %476 = vmatprep.subr.mxu0 0.0
  %477 = vmatpush1.msra.mxu0 %v132
  %478 = vmatprep.subr.mxu0 0.0
  %479 = vmatpush1.msra.mxu0 0.0
  %480 = vmatprep.subr.mxu0 0.0
  %481 = vmatpush1.msra.mxu0 0.0
  %482 = vmatprep.subr.mxu0 0.0
  %483 = vmatpush1.msra.mxu0 0.0
  %484 = vmatprep.subr.mxu0 0.0
  %485 = vmatpush1.msra.mxu0 0.0
  %486 = vmatprep.subr.mxu0 0.0
  %487 = vmatpush1.msra.mxu0 0.0
  %488 = vmatprep.subr.mxu0 0.0
  %489 = vmatpush1.msra.mxu0 0.0
  %490 = vmatprep.subr.mxu0 0.0
  %491 = vmatpush1.msra.mxu0 0.0
  %492 = vmatprep.subr.mxu0 0.0
  %493 = vmatpush1.msra.mxu0 0.0
  %494 = vmatprep.subr.mxu0 0.0
  %495 = vmatpush1.msra.mxu0 0.0
  %496 = vmatprep.subr.mxu0 0.0
  %497 = vmatpush1.msra.mxu0 0.0
  %498 = vmatprep.subr.mxu0 0.0
  %499 = vmatpush1.msra.mxu0 0.0
  %500 = vmatprep.subr.mxu0 0.0
  %501 = vmatpush1.msra.mxu0 0.0
  %502 = vmatprep.subr.mxu0 0.0
  %503 = vmatpush1.msra.mxu0 0.0
  %504 = vmatprep.subr.mxu0 0.0
  %505 = vmatpush1.msra.mxu0 0.0
  %506 = vmatprep.subr.mxu0 0.0
  %507 = vmatpush1.msra.mxu0 0.0
  %508 = vmatprep.subr.mxu0 0.0
  %509 = vmatpush1.msra.mxu0 0.0
  %510 = vmatprep.subr.mxu0 0.0
  %511 = vmatpush1.msra.mxu0 0.0
  %512 = vmatprep.subr.mxu0 0.0
  %513 = vmatpush1.msra.mxu0 0.0
  %514 = vmatprep.subr.mxu0 0.0
  %515 = vmatpush1.msra.mxu0 0.0
  %516 = vmatprep.subr.mxu0 0.0
  %517 = vmatpush1.msra.mxu0 0.0
  %518 = vmatprep.subr.mxu0 0.0
  %519 = vmatpush1.msra.mxu0 0.0
  %520 = vmatprep.subr.mxu0 0.0
  %521 = vmatpush1.msra.mxu0 0.0
  %522 = vmatprep.subr.mxu0 0.0
  %523 = vmatpush1.msra.mxu0 0.0
  %524 = vmatprep.subr.mxu0 0.0
  %525 = vmatpush1.msra.mxu0 0.0
  %526 = vmatprep.subr.mxu0 0.0
  %527 = vmatpush1.msra.mxu0 0.0
  %528 = vmatprep.subr.mxu0 0.0
  %529 = vmatpush1.msra.mxu0 0.0
  %530 = vmatprep.subr.mxu0 0.0
  %531 = vmatpush1.msra.mxu0 0.0
  %532 = vmatprep.subr.mxu0 0.0
  %533 = vmatpush1.msra.mxu0 0.0
  %534 = vmatprep.mubr.f32.mxu0 0.0
  %535 = vmatmul.mubr.f32.gmra.mrb[0].mxu0 %v468
  %v536 = vpop.f32.mrb[0].mxu0
  %v537 = vadd.f32 0.0, %v536
  %v538 = vpop.f32.mrb[0].mxu0
  %539 = vdwg.mxu0
  %v541 = vrot.slane %v537, 2
  %v543 = vadd.f32 %v121, %v541
  %v544 = vxor.u32 %v543, 2147483648
  %v545 = vmul.f32 %v544, 1.442695
  %v546 = vpow.pop %v545
  %v547 = vadd.f32 %v546, 1.0
  %v548 = vrcp.pop %v547
  %v549 = vmul.f32 1.0, %v548
  %v550 = vtanh.pop %v543
  %v552 = vrot.slane %v450, 6
  %v554 = vmul.f32 %v549, %v552
  %556 = vrot.lane.b32.xlu0 %v550, 32
  %v557 = vpop.permute.xlu0 %556
  %v559 = vmul.f32 %v549, %v557
  %561 = vrot.lane.b32.xlu0 %v559, 32
  %v562 = vpop.permute.xlu0 %561
  %v564 = vadd.f32 %v554, %v562
  %v565 = vtanh.pop %v564
  %567 = vrot.lane.b32.xlu0 %v565, 32
  %v568 = vpop.permute.xlu0 %567
  %v570 = vmul.f32 %v549, %v568
  %572 = vrot.lane.b32.xlu0 %v570, 64
  %v573 = vpop.permute.xlu0 %572
  %vm575 = vcmask 130054
  %576 = vst.msk [vmem:[#allocation2] sm:$0xc0] %vm575, %v573
  %vm577 = vcmask 261254
  %578 = vst.msk [vmem:[#allocation2 + $0x2] sm:$0xc0] %vm577, %v573
  %v579 = vrot.slane %v570, 6
  %580 = vrot.lane.b32.xlu0 %v579, 64
  %v581 = vpop.permute.xlu0 %580
  %v582 = vsel %vm133, %v581, 0
  %584 = vmatprep.subr.mxu0 0.0
  %585 = vmatpush1.msra.mxu0 %v129
  %586 = vmatprep.subr.mxu0 0.0
  %587 = vmatpush1.msra.mxu0 %v130
  %588 = vmatprep.subr.mxu0 0.0
  %589 = vmatpush1.msra.mxu0 %v131
  %590 = vmatprep.subr.mxu0 0.0
  %591 = vmatpush1.msra.mxu0 %v132
  %592 = vmatprep.subr.mxu0 0.0
  %593 = vmatpush1.msra.mxu0 0.0
  %594 = vmatprep.subr.mxu0 0.0
  %595 = vmatpush1.msra.mxu0 0.0
  %596 = vmatprep.subr.mxu0 0.0
  %597 = vmatpush1.msra.mxu0 0.0
  %598 = vmatprep.subr.mxu0 0.0
  %599 = vmatpush1.msra.mxu0 0.0
  %600 = vmatprep.subr.mxu0 0.0
  %601 = vmatpush1.msra.mxu0 0.0
  %602 = vmatprep.subr.mxu0 0.0
  %603 = vmatpush1.msra.mxu0 0.0
  %604 = vmatprep.subr.mxu0 0.0
  %605 = vmatpush1.msra.mxu0 0.0
  %606 = vmatprep.subr.mxu0 0.0
  %607 = vmatpush1.msra.mxu0 0.0
  %608 = vmatprep.subr.mxu0 0.0
  %609 = vmatpush1.msra.mxu0 0.0
  %610 = vmatprep.subr.mxu0 0.0
  %611 = vmatpush1.msra.mxu0 0.0
  %612 = vmatprep.subr.mxu0 0.0
  %613 = vmatpush1.msra.mxu0 0.0
  %614 = vmatprep.subr.mxu0 0.0
  %615 = vmatpush1.msra.mxu0 0.0
  %616 = vmatprep.subr.mxu0 0.0
  %617 = vmatpush1.msra.mxu0 0.0
  %618 = vmatprep.subr.mxu0 0.0
  %619 = vmatpush1.msra.mxu0 0.0
  %620 = vmatprep.subr.mxu0 0.0
  %621 = vmatpush1.msra.mxu0 0.0
  %622 = vmatprep.subr.mxu0 0.0
  %623 = vmatpush1.msra.mxu0 0.0
  %624 = vmatprep.subr.mxu0 0.0
  %625 = vmatpush1.msra.mxu0 0.0
  %626 = vmatprep.subr.mxu0 0.0
  %627 = vmatpush1.msra.mxu0 0.0
  %628 = vmatprep.subr.mxu0 0.0
  %629 = vmatpush1.msra.mxu0 0.0
  %630 = vmatprep.subr.mxu0 0.0
  %631 = vmatpush1.msra.mxu0 0.0
  %632 = vmatprep.subr.mxu0 0.0
  %633 = vmatpush1.msra.mxu0 0.0
  %634 = vmatprep.subr.mxu0 0.0
  %635 = vmatpush1.msra.mxu0 0.0
  %636 = vmatprep.subr.mxu0 0.0
  %637 = vmatpush1.msra.mxu0 0.0
  %638 = vmatprep.subr.mxu0 0.0
  %639 = vmatpush1.msra.mxu0 0.0
  %640 = vmatprep.subr.mxu0 0.0
  %641 = vmatpush1.msra.mxu0 0.0
  %642 = vmatprep.subr.mxu0 0.0
  %643 = vmatpush1.msra.mxu0 0.0
  %644 = vmatprep.subr.mxu0 0.0
  %645 = vmatpush1.msra.mxu0 0.0
  %646 = vmatprep.subr.mxu0 0.0
  %647 = vmatpush1.msra.mxu0 0.0
  %648 = vmatprep.mubr.f32.mxu0 0.0
  %649 = vmatmul.mubr.f32.gmra.mrb[0].mxu0 %v582
  %v650 = vpop.f32.mrb[0].mxu0
  %v651 = vadd.f32 0.0, %v650
  %v652 = vpop.f32.mrb[0].mxu0
  %653 = vdwg.mxu0
  %v654 = vadd.f32 %v126, %v651
  %v655 = vxor.u32 %v654, 2147483648
  %v656 = vmul.f32 %v655, 1.442695
  %v657 = vpow.pop %v656
  %v658 = vadd.f32 %v657, 1.0
  %v659 = vrcp.pop %v658
  %v660 = vmul.f32 1.0, %v659
  %v661 = vtanh.pop %v654
  %v663 = vrot.slane %v564, 6
  %v665 = vmul.f32 %v660, %v663
  %667 = vrot.lane.b32.xlu0 %v661, 32
  %v668 = vpop.permute.xlu0 %667
  %v670 = vmul.f32 %v660, %v668
  %672 = vrot.lane.b32.xlu0 %v670, 32
  %v673 = vpop.permute.xlu0 %672
  %v675 = vadd.f32 %v665, %v673
  %v676 = vtanh.pop %v675
  %678 = vrot.lane.b32.xlu0 %v676, 32
  %v679 = vpop.permute.xlu0 %678
  %v681 = vmul.f32 %v660, %v679
  %683 = vrot.lane.b32.xlu0 %v681, 64
  %v684 = vpop.permute.xlu0 %683
  %686 = vst.msk [vmem:[#allocation2 + $0x8] sm:$0x3] %vm236, %v684
  %687 = vst.msk [vmem:[#allocation2 + $0x6] sm:$0x3] %vm238, %v684
  %v688 = vsel %vm133, %v684, 0
  %690 = vmatprep.subr.mxu0 0.0
  %691 = vmatpush1.msra.mxu0 %v129
  %692 = vmatprep.subr.mxu0 0.0
  %693 = vmatpush1.msra.mxu0 %v130
  %694 = vmatprep.subr.mxu0 0.0
  %695 = vmatpush1.msra.mxu0 %v131
  %696 = vmatprep.subr.mxu0 0.0
  %697 = vmatpush1.msra.mxu0 %v132
  %698 = vmatprep.subr.mxu0 0.0
  %699 = vmatpush1.msra.mxu0 0.0
  %700 = vmatprep.subr.mxu0 0.0
  %701 = vmatpush1.msra.mxu0 0.0
  %702 = vmatprep.subr.mxu0 0.0
  %703 = vmatpush1.msra.mxu0 0.0
  %704 = vmatprep.subr.mxu0 0.0
  %705 = vmatpush1.msra.mxu0 0.0
  %706 = vmatprep.subr.mxu0 0.0
  %707 = vmatpush1.msra.mxu0 0.0
  %708 = vmatprep.subr.mxu0 0.0
  %709 = vmatpush1.msra.mxu0 0.0
  %710 = vmatprep.subr.mxu0 0.0
  %711 = vmatpush1.msra.mxu0 0.0
  %712 = vmatprep.subr.mxu0 0.0
  %713 = vmatpush1.msra.mxu0 0.0
  %714 = vmatprep.subr.mxu0 0.0
  %715 = vmatpush1.msra.mxu0 0.0
  %716 = vmatprep.subr.mxu0 0.0
  %717 = vmatpush1.msra.mxu0 0.0
  %718 = vmatprep.subr.mxu0 0.0
  %719 = vmatpush1.msra.mxu0 0.0
  %720 = vmatprep.subr.mxu0 0.0
  %721 = vmatpush1.msra.mxu0 0.0
  %722 = vmatprep.subr.mxu0 0.0
  %723 = vmatpush1.msra.mxu0 0.0
  %724 = vmatprep.subr.mxu0 0.0
  %725 = vmatpush1.msra.mxu0 0.0
  %726 = vmatprep.subr.mxu0 0.0
  %727 = vmatpush1.msra.mxu0 0.0
  %728 = vmatprep.subr.mxu0 0.0
  %729 = vmatpush1.msra.mxu0 0.0
  %730 = vmatprep.subr.mxu0 0.0
  %731 = vmatpush1.msra.mxu0 0.0
  %732 = vmatprep.subr.mxu0 0.0
  %733 = vmatpush1.msra.mxu0 0.0
  %734 = vmatprep.subr.mxu0 0.0
  %735 = vmatpush1.msra.mxu0 0.0
  %736 = vmatprep.subr.mxu0 0.0
  %737 = vmatpush1.msra.mxu0 0.0
  %738 = vmatprep.subr.mxu0 0.0
  %739 = vmatpush1.msra.mxu0 0.0
  %740 = vmatprep.subr.mxu0 0.0
  %741 = vmatpush1.msra.mxu0 0.0
  %742 = vmatprep.subr.mxu0 0.0
  %743 = vmatpush1.msra.mxu0 0.0
  %744 = vmatprep.subr.mxu0 0.0
  %745 = vmatpush1.msra.mxu0 0.0
  %746 = vmatprep.subr.mxu0 0.0
  %747 = vmatpush1.msra.mxu0 0.0
  %748 = vmatprep.subr.mxu0 0.0
  %749 = vmatpush1.msra.mxu0 0.0
  %750 = vmatprep.subr.mxu0 0.0
  %751 = vmatpush1.msra.mxu0 0.0
  %752 = vmatprep.subr.mxu0 0.0
  %753 = vmatpush1.msra.mxu0 0.0
  %754 = vmatprep.mubr.f32.mxu0 0.0
  %755 = vmatmul.mubr.f32.gmra.mrb[0].mxu0 %v688
  %v756 = vpop.f32.mrb[0].mxu0
  %v757 = vadd.f32 0.0, %v756
  %v758 = vpop.f32.mrb[0].mxu0
  %759 = vdwg.mxu0
  %v761 = vrot.slane %v757, 6
  %v763 = vadd.f32 %v126, %v761
  %v764 = vxor.u32 %v763, 2147483648
  %v765 = vmul.f32 %v764, 1.442695
  %v766 = vpow.pop %v765
  %v767 = vadd.f32 %v766, 1.0
  %v768 = vrcp.pop %v767
  %v769 = vmul.f32 1.0, %v768
  %v770 = vtanh.pop %v763
  %v772 = vrot.slane %v675, 6
  %v774 = vmul.f32 %v769, %v772
  %776 = vrot.lane.b32.xlu0 %v770, 32
  %v777 = vpop.permute.xlu0 %776
  %v779 = vmul.f32 %v769, %v777
  %781 = vrot.lane.b32.xlu0 %v779, 32
  %v782 = vpop.permute.xlu0 %781
  %v784 = vadd.f32 %v774, %v782
  %v785 = vtanh.pop %v784
  %787 = vrot.lane.b32.xlu0 %v785, 32
  %v788 = vpop.permute.xlu0 %787
  %v790 = vmul.f32 %v769, %v788
  %792 = vrot.lane.b32.xlu0 %v790, 64
  %v793 = vpop.permute.xlu0 %792
  %795 = vst.msk [vmem:[#allocation2 + $0x8] sm:$0xc] %vm347, %v793
  %796 = vst.msk [vmem:[#allocation2 + $0x2] sm:$0xc] %vm349, %v793
  %v797 = vrot.slane %v790, 2
  %798 = vrot.lane.b32.xlu0 %v797, 64
  %v799 = vpop.permute.xlu0 %798
  %v800 = vsel %vm133, %v799, 0
  %802 = vmatprep.subr.mxu0 0.0
  %803 = vmatpush1.msra.mxu0 %v129
  %804 = vmatprep.subr.mxu0 0.0
  %805 = vmatpush1.msra.mxu0 %v130
  %806 = vmatprep.subr.mxu0 0.0
  %807 = vmatpush1.msra.mxu0 %v131
  %808 = vmatprep.subr.mxu0 0.0
  %809 = vmatpush1.msra.mxu0 %v132
  %810 = vmatprep.subr.mxu0 0.0
  %811 = vmatpush1.msra.mxu0 0.0
  %812 = vmatprep.subr.mxu0 0.0
  %813 = vmatpush1.msra.mxu0 0.0
  %814 = vmatprep.subr.mxu0 0.0
  %815 = vmatpush1.msra.mxu0 0.0
  %816 = vmatprep.subr.mxu0 0.0
  %817 = vmatpush1.msra.mxu0 0.0
  %818 = vmatprep.subr.mxu0 0.0
  %819 = vmatpush1.msra.mxu0 0.0
  %820 = vmatprep.subr.mxu0 0.0
  %821 = vmatpush1.msra.mxu0 0.0
  %822 = vmatprep.subr.mxu0 0.0
  %823 = vmatpush1.msra.mxu0 0.0
  %824 = vmatprep.subr.mxu0 0.0
  %825 = vmatpush1.msra.mxu0 0.0
  %826 = vmatprep.subr.mxu0 0.0
  %827 = vmatpush1.msra.mxu0 0.0
  %828 = vmatprep.subr.mxu0 0.0
  %829 = vmatpush1.msra.mxu0 0.0
  %830 = vmatprep.subr.mxu0 0.0
  %831 = vmatpush1.msra.mxu0 0.0
  %832 = vmatprep.subr.mxu0 0.0
  %833 = vmatpush1.msra.mxu0 0.0
  %834 = vmatprep.subr.mxu0 0.0
  %835 = vmatpush1.msra.mxu0 0.0
  %836 = vmatprep.subr.mxu0 0.0
  %837 = vmatpush1.msra.mxu0 0.0
  %838 = vmatprep.subr.mxu0 0.0
  %839 = vmatpush1.msra.mxu0 0.0
  %840 = vmatprep.subr.mxu0 0.0
  %841 = vmatpush1.msra.mxu0 0.0
  %842 = vmatprep.subr.mxu0 0.0
  %843 = vmatpush1.msra.mxu0 0.0
  %844 = vmatprep.subr.mxu0 0.0
  %845 = vmatpush1.msra.mxu0 0.0
  %846 = vmatprep.subr.mxu0 0.0
  %847 = vmatpush1.msra.mxu0 0.0
  %848 = vmatprep.subr.mxu0 0.0
  %849 = vmatpush1.msra.mxu0 0.0
  %850 = vmatprep.subr.mxu0 0.0
  %851 = vmatpush1.msra.mxu0 0.0
  %852 = vmatprep.subr.mxu0 0.0
  %853 = vmatpush1.msra.mxu0 0.0
  %854 = vmatprep.subr.mxu0 0.0
  %855 = vmatpush1.msra.mxu0 0.0
  %856 = vmatprep.subr.mxu0 0.0
  %857 = vmatpush1.msra.mxu0 0.0
  %858 = vmatprep.subr.mxu0 0.0
  %859 = vmatpush1.msra.mxu0 0.0
  %860 = vmatprep.subr.mxu0 0.0
  %861 = vmatpush1.msra.mxu0 0.0
  %862 = vmatprep.subr.mxu0 0.0
  %863 = vmatpush1.msra.mxu0 0.0
  %864 = vmatprep.subr.mxu0 0.0
  %865 = vmatpush1.msra.mxu0 0.0
  %866 = vmatprep.mubr.f32.mxu0 0.0
  %867 = vmatmul.mubr.f32.gmra.mrb[0].mxu0 %v800
  %v868 = vpop.f32.mrb[0].mxu0
  %v869 = vadd.f32 0.0, %v868
  %v870 = vpop.f32.mrb[0].mxu0
  %871 = vdwg.mxu0
  %v873 = vrot.slane %v869, 4
  %v875 = vadd.f32 %v126, %v873
  %v876 = vxor.u32 %v875, 2147483648
  %v877 = vmul.f32 %v876, 1.442695
  %v878 = vpow.pop %v877
  %v879 = vadd.f32 %v878, 1.0
  %v880 = vrcp.pop %v879
  %v881 = vmul.f32 1.0, %v880
  %v882 = vtanh.pop %v875
  %v884 = vrot.slane %v784, 6
  %v886 = vmul.f32 %v881, %v884
  %888 = vrot.lane.b32.xlu0 %v882, 32
  %v889 = vpop.permute.xlu0 %888
  %v891 = vmul.f32 %v881, %v889
  %893 = vrot.lane.b32.xlu0 %v891, 32
  %v894 = vpop.permute.xlu0 %893
  %v896 = vadd.f32 %v886, %v894
  %v897 = vtanh.pop %v896
  %899 = vrot.lane.b32.xlu0 %v897, 32
  %v900 = vpop.permute.xlu0 %899
  %v902 = vmul.f32 %v881, %v900
  %904 = vrot.lane.b32.xlu0 %v902, 64
  %v905 = vpop.permute.xlu0 %904
  %907 = vst.msk [vmem:[#allocation2 + $0x8] sm:$0x30] %vm461, %v905
  %908 = vst.msk [vmem:[#allocation2 - $0x2] sm:$0x30] %vm463, %v905
  %v909 = vrot.slane %v902, 4
  %910 = vrot.lane.b32.xlu0 %v909, 64
  %v911 = vpop.permute.xlu0 %910
  %v912 = vsel %vm133, %v911, 0
  %914 = vmatprep.subr.mxu0 0.0
  %915 = vmatpush1.msra.mxu0 %v129
  %916 = vmatprep.subr.mxu0 0.0
  %917 = vmatpush1.msra.mxu0 %v130
  %918 = vmatprep.subr.mxu0 0.0
  %919 = vmatpush1.msra.mxu0 %v131
  %920 = vmatprep.subr.mxu0 0.0
  %921 = vmatpush1.msra.mxu0 %v132
  %922 = vmatprep.subr.mxu0 0.0
  %923 = vmatpush1.msra.mxu0 0.0
  %924 = vmatprep.subr.mxu0 0.0
  %925 = vmatpush1.msra.mxu0 0.0
  %926 = vmatprep.subr.mxu0 0.0
  %927 = vmatpush1.msra.mxu0 0.0
  %928 = vmatprep.subr.mxu0 0.0
  %929 = vmatpush1.msra.mxu0 0.0
  %930 = vmatprep.subr.mxu0 0.0
  %931 = vmatpush1.msra.mxu0 0.0
  %932 = vmatprep.subr.mxu0 0.0
  %933 = vmatpush1.msra.mxu0 0.0
  %934 = vmatprep.subr.mxu0 0.0
  %935 = vmatpush1.msra.mxu0 0.0
  %936 = vmatprep.subr.mxu0 0.0
  %937 = vmatpush1.msra.mxu0 0.0
  %938 = vmatprep.subr.mxu0 0.0
  %939 = vmatpush1.msra.mxu0 0.0
  %940 = vmatprep.subr.mxu0 0.0
  %941 = vmatpush1.msra.mxu0 0.0
  %942 = vmatprep.subr.mxu0 0.0
  %943 = vmatpush1.msra.mxu0 0.0
  %944 = vmatprep.subr.mxu0 0.0
  %945 = vmatpush1.msra.mxu0 0.0
  %946 = vmatprep.subr.mxu0 0.0
  %947 = vmatpush1.msra.mxu0 0.0
  %948 = vmatprep.subr.mxu0 0.0
  %949 = vmatpush1.msra.mxu0 0.0
  %950 = vmatprep.subr.mxu0 0.0
  %951 = vmatpush1.msra.mxu0 0.0
  %952 = vmatprep.subr.mxu0 0.0
  %953 = vmatpush1.msra.mxu0 0.0
  %954 = vmatprep.subr.mxu0 0.0
  %955 = vmatpush1.msra.mxu0 0.0
  %956 = vmatprep.subr.mxu0 0.0
  %957 = vmatpush1.msra.mxu0 0.0
  %958 = vmatprep.subr.mxu0 0.0
  %959 = vmatpush1.msra.mxu0 0.0
  %960 = vmatprep.subr.mxu0 0.0
  %961 = vmatpush1.msra.mxu0 0.0
  %962 = vmatprep.subr.mxu0 0.0
  %963 = vmatpush1.msra.mxu0 0.0
  %964 = vmatprep.subr.mxu0 0.0
  %965 = vmatpush1.msra.mxu0 0.0
  %966 = vmatprep.subr.mxu0 0.0
  %967 = vmatpush1.msra.mxu0 0.0
  %968 = vmatprep.subr.mxu0 0.0
  %969 = vmatpush1.msra.mxu0 0.0
  %970 = vmatprep.subr.mxu0 0.0
  %971 = vmatpush1.msra.mxu0 0.0
  %972 = vmatprep.subr.mxu0 0.0
  %973 = vmatpush1.msra.mxu0 0.0
  %974 = vmatprep.subr.mxu0 0.0
  %975 = vmatpush1.msra.mxu0 0.0
  %976 = vmatprep.subr.mxu0 0.0
  %977 = vmatpush1.msra.mxu0 0.0
  %978 = vmatprep.mubr.f32.mxu0 0.0
  %979 = vmatmul.mubr.f32.gmra.mrb[0].mxu0 %v912
  %v980 = vpop.f32.mrb[0].mxu0
  %v981 = vadd.f32 0.0, %v980
  %v982 = vpop.f32.mrb[0].mxu0
  %983 = vdwg.mxu0
  %v985 = vrot.slane %v981, 2
  %v987 = vadd.f32 %v126, %v985
  %v988 = vxor.u32 %v987, 2147483648
  %v989 = vmul.f32 %v988, 1.442695
  %v990 = vpow.pop %v989
  %v991 = vadd.f32 %v990, 1.0
  %v992 = vrcp.pop %v991
  %v993 = vmul.f32 1.0, %v992
  %v994 = vtanh.pop %v987
  %v996 = vrot.slane %v896, 6
  %v998 = vmul.f32 %v993, %v996
  %1000 = vrot.lane.b32.xlu0 %v994, 32
  %v1001 = vpop.permute.xlu0 %1000
  %v1003 = vmul.f32 %v993, %v1001
  %1005 = vrot.lane.b32.xlu0 %v1003, 32
  %v1006 = vpop.permute.xlu0 %1005
  %v1008 = vadd.f32 %v998, %v1006
  %v1009 = vtanh.pop %v1008
  %1011 = vrot.lane.b32.xlu0 %v1009, 32
  %v1012 = vpop.permute.xlu0 %1011
  %v1014 = vmul.f32 %v993, %v1012
  %1016 = vrot.lane.b32.xlu0 %v1014, 64
  %v1017 = vpop.permute.xlu0 %1016
  %1019 = vst.msk [vmem:[#allocation2 + $0x8] sm:$0xc0] %vm575, %v1017
  %1020 = vst.msk [vmem:[#allocation2 - $0x6] sm:$0xc0] %vm577, %v1017
  %v1021 = vld [vmem:[#allocation2] sm:$0xff]
  %v1022 = vld [vmem:[#allocation2 + $0x8] sm:$0xff]
  %v1023 = vld [vmem:[%s5] sm:$0xff]
  %v1024 = vld [vmem:[%s5 + $0x8] sm:$0xff]
  %v1025 = vld [vmem:[%s5 + $0x10] sm:$0xff]
  %v1026 = vld [vmem:[%s5 + $0x18] sm:$0xff]
  %v1027 = vld [vmem:[%s5 + $0x20] sm:$0xff]
  %v1028 = vld [vmem:[%s5 + $0x28] sm:$0xff]
  %v1029 = vld [vmem:[%s5 + $0x30] sm:$0xff]
  %v1030 = vld [vmem:[%s5 + $0x38] sm:$0xff]
  %v1031 = vld [vmem:[%s6] sm:$0x3]
  %v1033 = vlaneseq
  %v1034 = vshrl.u32 %v1033, 7
  %v1035 = vsub.s32 0, %v1034
  %v1036 = vrot.slane %v1031, %v1035
  %v1037 = vlaneseq
  %v1038 = vshrl.u32 %v1037, 7
  %v1039 = vsub.s32 1, %v1038
  %v1040 = vrot.slane %v1031, %v1039
  %v1044 = vsel %vm133, %v1021, 0
  %v1047 = vsel %vm133, %v1022, 0
  %1049 = vmatprep.subr.mxu0 %v1024
  %1050 = vmatpush1.msra.mxu0 %v1023
  %1051 = vmatprep.subr.mxu0 %v1026
  %1052 = vmatpush1.msra.mxu0 %v1025
  %1053 = vmatprep.subr.mxu0 %v1028
  %1054 = vmatpush1.msra.mxu0 %v1027
  %1055 = vmatprep.subr.mxu0 %v1030
  %1056 = vmatpush1.msra.mxu0 %v1029
  %1057 = vmatprep.subr.mxu0 0.0
  %1058 = vmatpush1.msra.mxu0 0.0
  %1059 = vmatprep.subr.mxu0 0.0
  %1060 = vmatpush1.msra.mxu0 0.0
  %1061 = vmatprep.subr.mxu0 0.0
  %1062 = vmatpush1.msra.mxu0 0.0
  %1063 = vmatprep.subr.mxu0 0.0
  %1064 = vmatpush1.msra.mxu0 0.0
  %1065 = vmatprep.subr.mxu0 0.0
  %1066 = vmatpush1.msra.mxu0 0.0
  %1067 = vmatprep.subr.mxu0 0.0
  %1068 = vmatpush1.msra.mxu0 0.0
  %1069 = vmatprep.subr.mxu0 0.0
  %1070 = vmatpush1.msra.mxu0 0.0
  %1071 = vmatprep.subr.mxu0 0.0
  %1072 = vmatpush1.msra.mxu0 0.0
  %1073 = vmatprep.subr.mxu0 0.0
  %1074 = vmatpush1.msra.mxu0 0.0
  %1075 = vmatprep.subr.mxu0 0.0
  %1076 = vmatpush1.msra.mxu0 0.0
  %1077 = vmatprep.subr.mxu0 0.0
  %1078 = vmatpush1.msra.mxu0 0.0
  %1079 = vmatprep.subr.mxu0 0.0
  %1080 = vmatpush1.msra.mxu0 0.0
  %1081 = vmatprep.subr.mxu0 0.0
  %1082 = vmatpush1.msra.mxu0 0.0
  %1083 = vmatprep.subr.mxu0 0.0
  %1084 = vmatpush1.msra.mxu0 0.0
  %1085 = vmatprep.subr.mxu0 0.0
  %1086 = vmatpush1.msra.mxu0 0.0
  %1087 = vmatprep.subr.mxu0 0.0
  %1088 = vmatpush1.msra.mxu0 0.0
  %1089 = vmatprep.subr.mxu0 0.0
  %1090 = vmatpush1.msra.mxu0 0.0
  %1091 = vmatprep.subr.mxu0 0.0
  %1092 = vmatpush1.msra.mxu0 0.0
  %1093 = vmatprep.subr.mxu0 0.0
  %1094 = vmatpush1.msra.mxu0 0.0
  %1095 = vmatprep.subr.mxu0 0.0
  %1096 = vmatpush1.msra.mxu0 0.0
  %1097 = vmatprep.subr.mxu0 0.0
  %1098 = vmatpush1.msra.mxu0 0.0
  %1099 = vmatprep.subr.mxu0 0.0
  %1100 = vmatpush1.msra.mxu0 0.0
  %1101 = vmatprep.subr.mxu0 0.0
  %1102 = vmatpush1.msra.mxu0 0.0
  %1103 = vmatprep.subr.mxu0 0.0
  %1104 = vmatpush1.msra.mxu0 0.0
  %1105 = vmatprep.subr.mxu0 0.0
  %1106 = vmatpush1.msra.mxu0 0.0
  %1107 = vmatprep.subr.mxu0 0.0
  %1108 = vmatpush1.msra.mxu0 0.0
  %1109 = vmatprep.subr.mxu0 0.0
  %1110 = vmatpush1.msra.mxu0 0.0
  %1111 = vmatprep.subr.mxu0 0.0
  %1112 = vmatpush1.msra.mxu0 0.0
  %1113 = vmatprep.mubr.f32.mxu0 0.0
  %1114 = vmatmul.mubr.f32.gmra.mrb[0].mxu0 %v1044
  %v1115 = vpop.f32.mrb[0].mxu0
  %v1116 = vadd.f32 %v1036, %v1115
  %v1117 = vpop.f32.mrb[0].mxu0
  %v1118 = vadd.f32 %v1040, %v1117
  %1119 = vmatprep.mubr.f32.mxu0 0.0
  %1120 = vmatmul.mubr.f32.gmra.mrb[0].mxu0 %v1047
  %v1121 = vpop.f32.mrb[0].mxu0
  %v1122 = vadd.f32 %v1036, %v1121
  %v1123 = vpop.f32.mrb[0].mxu0
  %v1124 = vadd.f32 %v1040, %v1123
  %1125 = vdwg.mxu0
  %v1126 = vmax.f32 %v1116, 0.0
  %v1127 = vmax.f32 %v1118, 0.0
  %v1128 = vmax.f32 %v1122, 0.0
  %v1129 = vmax.f32 %v1124, 0.0
  %v1130 = vld [vmem:[%s0] sm:$0xff]
  %v1131 = vld [vmem:[%s0 + $0x8] sm:$0xff]
  %v1132 = vlaneseq
  %v1133 = vand.u32 %v1132, 127
  %1134 = vset.pattern.permute.xlu0 0
  %1135 = vperm.xlu0 %1134, %v1130
  %v1136 = vpop.permute.xlu0 %1135
  %1137 = vset.pattern.permute.xlu0 0
  %1138 = vperm.xlu0 %1137, %v1131
  %v1139 = vpop.permute.xlu0 %1138
  %vm1140 = vcmp.eq.s32.totalorder %v1133, %v1136
  %vm1141 = vcmp.eq.s32.totalorder %v1133, %v1139
  %v1142 = vsel %vm1140, 1, 0
  %v1143 = vsel %vm1141, 1, 0
  %v1144 = vcvt.s32.f32 %v1142
  %v1145 = vcvt.s32.f32 %v1143
  %vm1146 = vcmask 130048
  %v1148 = vsel %vm1146, %v1144, 0
  %v1151 = vsel %vm1146, %v1145, 0
  %1153 = vmatprep.subr.mxu0 0.0
  %1154 = vmatpush1.msra.mxu0 %v1127
  %1155 = vmatprep.subr.mxu0 0.0
  %1156 = vmatpush1.msra.mxu0 %v1129
  %1157 = vmatprep.subr.mxu0 0.0
  %1158 = vmatpush1.msra.mxu0 0.0
  %1159 = vmatprep.subr.mxu0 0.0
  %1160 = vmatpush1.msra.mxu0 0.0
  %1161 = vmatprep.subr.mxu0 0.0
  %1162 = vmatpush1.msra.mxu0 0.0
  %1163 = vmatprep.subr.mxu0 0.0
  %1164 = vmatpush1.msra.mxu0 0.0
  %1165 = vmatprep.subr.mxu0 0.0
  %1166 = vmatpush1.msra.mxu0 0.0
  %1167 = vmatprep.subr.mxu0 0.0
  %1168 = vmatpush1.msra.mxu0 0.0
  %1169 = vmatprep.subr.mxu0 0.0
  %1170 = vmatpush1.msra.mxu0 0.0
  %1171 = vmatprep.subr.mxu0 0.0
  %1172 = vmatpush1.msra.mxu0 0.0
  %1173 = vmatprep.subr.mxu0 0.0
  %1174 = vmatpush1.msra.mxu0 0.0
  %1175 = vmatprep.subr.mxu0 0.0
  %1176 = vmatpush1.msra.mxu0 0.0
  %1177 = vmatprep.subr.mxu0 0.0
  %1178 = vmatpush1.msra.mxu0 0.0
  %1179 = vmatprep.subr.mxu0 0.0
  %1180 = vmatpush1.msra.mxu0 0.0
  %1181 = vmatprep.subr.mxu0 0.0
  %1182 = vmatpush1.msra.mxu0 0.0
  %1183 = vmatprep.subr.mxu0 0.0
  %1184 = vmatpush1.msra.mxu0 0.0
  %1185 = vmatprep.subr.mxu0 0.0
  %1186 = vmatpush1.msra.mxu0 0.0
  %1187 = vmatprep.subr.mxu0 0.0
  %1188 = vmatpush1.msra.mxu0 0.0
  %1189 = vmatprep.subr.mxu0 0.0
  %1190 = vmatpush1.msra.mxu0 0.0
  %1191 = vmatprep.subr.mxu0 0.0
  %1192 = vmatpush1.msra.mxu0 0.0
  %1193 = vmatprep.subr.mxu0 0.0
  %1194 = vmatpush1.msra.mxu0 0.0
  %1195 = vmatprep.subr.mxu0 0.0
  %1196 = vmatpush1.msra.mxu0 0.0
  %1197 = vmatprep.subr.mxu0 0.0
  %1198 = vmatpush1.msra.mxu0 0.0
  %1199 = vmatprep.subr.mxu0 0.0
  %1200 = vmatpush1.msra.mxu0 0.0
  %1201 = vmatprep.subr.mxu0 0.0
  %1202 = vmatpush1.msra.mxu0 0.0
  %1203 = vmatprep.subr.mxu0 0.0
  %1204 = vmatpush1.msra.mxu0 0.0
  %1205 = vmatprep.subr.mxu0 0.0
  %1206 = vmatpush1.msra.mxu0 0.0
  %1207 = vmatprep.subr.mxu0 0.0
  %1208 = vmatpush1.msra.mxu0 0.0
  %1209 = vmatprep.subr.mxu0 0.0
  %1210 = vmatpush1.msra.mxu0 0.0
  %1211 = vmatprep.subr.mxu0 0.0
  %1212 = vmatpush1.msra.mxu0 0.0
  %1213 = vmatprep.subr.mxu0 0.0
  %1214 = vmatpush1.msra.mxu0 0.0
  %1215 = vmatprep.subr.mxu0 0.0
  %1216 = vmatpush1.msra.mxu0 0.0
  %1217 = vmatprep.mubr.f32.mxu0 0.0
  %1218 = vmatmul.mubr.f32.gmra.mrb[0].mxu0 %v1148
  %v1219 = vpop.f32.mrb[0].mxu0
  %v1220 = vadd.f32 0.0, %v1219
  %v1221 = vpop.f32.mrb[0].mxu0
  %1222 = vmatprep.mubr.f32.mxu0 0.0
  %1223 = vmatmul.mubr.f32.gmra.mrb[0].mxu0 %v1151
  %v1224 = vpop.f32.mrb[0].mxu0
  %v1225 = vadd.f32 0.0, %v1224
  %v1226 = vpop.f32.mrb[0].mxu0
  %1227 = vdwg.mxu0
  %v1228 = vld [vmem:[%s7] sm:$0xff]
  %v1229 = vld [vmem:[%s7 + $0x8] sm:$0xff]
  %v1230 = vld [vmem:[%s7 + $0x10] sm:$0xff]
  %v1231 = vld [vmem:[%s7 + $0x18] sm:$0xff]
  %v1232 = vld [vmem:[%s7 + $0x20] sm:$0xff]
  %v1233 = vld [vmem:[%s7 + $0x28] sm:$0xff]
  %v1234 = vld [vmem:[%s7 + $0x30] sm:$0xff]
  %v1235 = vld [vmem:[%s7 + $0x38] sm:$0xff]
  %v1236 = vld [vmem:[%s7 + $0x40] sm:$0xff]
  %v1237 = vld [vmem:[%s7 + $0x48] sm:$0xff]
  %v1238 = vld [vmem:[%s7 + $0x50] sm:$0xff]
  %v1239 = vld [vmem:[%s7 + $0x58] sm:$0xff]
  %v1240 = vld [vmem:[%s7 + $0x60] sm:$0xff]
  %v1241 = vld [vmem:[%s7 + $0x68] sm:$0xff]
  %v1242 = vld [vmem:[%s7 + $0x70] sm:$0xff]
  %v1243 = vld [vmem:[%s7 + $0x78] sm:$0xff]
  %v1244 = vld [vmem:[%s7 + $0x80] sm:$0xff]
  %v1245 = vld [vmem:[%s7 + $0x88] sm:$0xff]
  %v1246 = vld [vmem:[%s7 + $0x90] sm:$0xff]
  %v1247 = vld [vmem:[%s7 + $0x98] sm:$0xff]
  %v1248 = vld [vmem:[%s7 + $0xa0] sm:$0xff]
  %v1249 = vld [vmem:[%s7 + $0xa8] sm:$0xff]
  %v1250 = vld [vmem:[%s7 + $0xb0] sm:$0xff]
  %v1251 = vld [vmem:[%s7 + $0xb8] sm:$0xff]
  %v1252 = vld [vmem:[%s7 + $0xc0] sm:$0xff]
  %v1253 = vld [vmem:[%s7 + $0xc8] sm:$0xff]
  %v1254 = vld [vmem:[%s7 + $0xd0] sm:$0xff]
  %v1255 = vld [vmem:[%s7 + $0xd8] sm:$0xff]
  %v1256 = vld [vmem:[%s7 + $0xe0] sm:$0xff]
  %v1257 = vld [vmem:[%s7 + $0xe8] sm:$0xff]
  %v1258 = vld [vmem:[%s7 + $0xf0] sm:$0xff]
  %v1259 = vld [vmem:[%s7 + $0xf8] sm:$0xff]
  %v1260 = vld [vmem:[%s7 + $0x100] sm:$0xff]
  %v1261 = vld [vmem:[%s7 + $0x108] sm:$0xff]
  %v1262 = vld [vmem:[%s7 + $0x110] sm:$0xff]
  %v1263 = vld [vmem:[%s7 + $0x118] sm:$0xff]
  %v1264 = vld [vmem:[%s7 + $0x120] sm:$0xff]
  %v1265 = vld [vmem:[%s7 + $0x128] sm:$0xff]
  %v1266 = vld [vmem:[%s7 + $0x130] sm:$0xff]
  %v1267 = vld [vmem:[%s7 + $0x138] sm:$0xff]
  %v1268 = vld [vmem:[%s7 + $0x140] sm:$0xff]
  %v1269 = vld [vmem:[%s7 + $0x148] sm:$0xff]
  %v1270 = vld [vmem:[%s7 + $0x150] sm:$0xff]
  %v1271 = vld [vmem:[%s7 + $0x158] sm:$0xff]
  %v1272 = vld [vmem:[%s7 + $0x160] sm:$0xff]
  %v1273 = vld [vmem:[%s7 + $0x168] sm:$0xff]
  %v1274 = vld [vmem:[%s7 + $0x170] sm:$0xff]
  %v1275 = vld [vmem:[%s7 + $0x178] sm:$0xff]
  %v1276 = vld [vmem:[%s7 + $0x180] sm:$0xff]
  %v1277 = vld [vmem:[%s7 + $0x188] sm:$0xff]
  %v1278 = vld [vmem:[%s7 + $0x190] sm:$0xff]
  %v1279 = vld [vmem:[%s7 + $0x198] sm:$0xff]
  %v1280 = vld [vmem:[%s7 + $0x1a0] sm:$0xff]
  %v1281 = vld [vmem:[%s7 + $0x1a8] sm:$0xff]
  %v1282 = vld [vmem:[%s7 + $0x1b0] sm:$0xff]
  %v1283 = vld [vmem:[%s7 + $0x1b8] sm:$0xff]
  %v1284 = vld [vmem:[%s7 + $0x1c0] sm:$0xff]
  %v1285 = vld [vmem:[%s7 + $0x1c8] sm:$0xff]
  %v1286 = vld [vmem:[%s7 + $0x1d0] sm:$0xff]
  %v1287 = vld [vmem:[%s7 + $0x1d8] sm:$0xff]
  %v1288 = vld [vmem:[%s7 + $0x1e0] sm:$0xff]
  %v1289 = vld [vmem:[%s7 + $0x1e8] sm:$0xff]
  %v1290 = vld [vmem:[%s7 + $0x1f0] sm:$0xff]
  %v1291 = vld [vmem:[%s7 + $0x1f8] sm:$0xff]
  %v1292 = vld [vmem:[%s7 + $0x200] sm:$0xff]
  %v1293 = vld [vmem:[%s7 + $0x208] sm:$0xff]
  %v1294 = vld [vmem:[%s7 + $0x210] sm:$0xff]
  %v1295 = vld [vmem:[%s7 + $0x218] sm:$0xff]
  %v1296 = vld [vmem:[%s7 + $0x220] sm:$0xff]
  %v1297 = vld [vmem:[%s7 + $0x228] sm:$0xff]
  %v1298 = vld [vmem:[%s7 + $0x230] sm:$0xff]
  %v1299 = vld [vmem:[%s7 + $0x238] sm:$0xff]
  %v1300 = vld [vmem:[%s7 + $0x240] sm:$0xff]
  %v1301 = vld [vmem:[%s7 + $0x248] sm:$0xff]
  %v1302 = vld [vmem:[%s7 + $0x250] sm:$0xff]
  %v1303 = vld [vmem:[%s7 + $0x258] sm:$0xff]
  %v1304 = vld [vmem:[%s7 + $0x260] sm:$0xff]
  %v1305 = vld [vmem:[%s7 + $0x268] sm:$0xff]
  %v1306 = vld [vmem:[%s7 + $0x270] sm:$0xff]
  %v1307 = vld [vmem:[%s7 + $0x278] sm:$0xff]
  %v1308 = vld [vmem:[%s7 + $0x280] sm:$0xff]
  %v1309 = vld [vmem:[%s7 + $0x288] sm:$0xff]
  %v1310 = vld [vmem:[%s7 + $0x290] sm:$0xff]
  %v1311 = vld [vmem:[%s7 + $0x298] sm:$0xff]
  %v1312 = vld [vmem:[%s7 + $0x2a0] sm:$0xff]
  %v1313 = vld [vmem:[%s7 + $0x2a8] sm:$0xff]
  %v1314 = vld [vmem:[%s7 + $0x2b0] sm:$0xff]
  %v1315 = vld [vmem:[%s7 + $0x2b8] sm:$0xff]
  %v1316 = vld [vmem:[%s7 + $0x2c0] sm:$0xff]
  %v1317 = vld [vmem:[%s7 + $0x2c8] sm:$0xff]
  %v1318 = vld [vmem:[%s7 + $0x2d0] sm:$0xff]
  %v1319 = vld [vmem:[%s7 + $0x2d8] sm:$0xff]
  %v1320 = vld [vmem:[%s7 + $0x2e0] sm:$0xff]
  %v1321 = vld [vmem:[%s7 + $0x2e8] sm:$0xff]
  %v1322 = vld [vmem:[%s7 + $0x2f0] sm:$0xff]
  %v1323 = vld [vmem:[%s7 + $0x2f8] sm:$0xff]
  %v1324 = vld [vmem:[%s7 + $0x300] sm:$0xff]
  %v1325 = vld [vmem:[%s7 + $0x308] sm:$0xff]
  %v1326 = vld [vmem:[%s7 + $0x310] sm:$0xff]
  %v1327 = vld [vmem:[%s7 + $0x318] sm:$0xff]
  %v1328 = vld [vmem:[%s7 + $0x320] sm:$0xff]
  %v1329 = vld [vmem:[%s7 + $0x328] sm:$0xff]
  %v1330 = vld [vmem:[%s7 + $0x330] sm:$0xff]
  %v1331 = vld [vmem:[%s7 + $0x338] sm:$0xff]
  %v1332 = vld [vmem:[%s7 + $0x340] sm:$0xff]
  %v1333 = vld [vmem:[%s7 + $0x348] sm:$0xff]
  %v1334 = vld [vmem:[%s7 + $0x350] sm:$0xff]
  %v1335 = vld [vmem:[%s7 + $0x358] sm:$0xff]
  %v1336 = vld [vmem:[%s7 + $0x360] sm:$0xff]
  %v1337 = vld [vmem:[%s7 + $0x368] sm:$0xff]
  %v1338 = vld [vmem:[%s7 + $0x370] sm:$0xff]
  %v1339 = vld [vmem:[%s7 + $0x378] sm:$0xff]
  %v1340 = vld [vmem:[%s7 + $0x380] sm:$0xff]
  %v1341 = vld [vmem:[%s7 + $0x388] sm:$0xff]
  %v1342 = vld [vmem:[%s7 + $0x390] sm:$0xff]
  %v1343 = vld [vmem:[%s7 + $0x398] sm:$0xff]
  %v1344 = vld [vmem:[%s7 + $0x3a0] sm:$0xff]
  %v1345 = vld [vmem:[%s7 + $0x3a8] sm:$0xff]
  %v1346 = vld [vmem:[%s7 + $0x3b0] sm:$0xff]
  %v1347 = vld [vmem:[%s7 + $0x3b8] sm:$0xff]
  %v1348 = vld [vmem:[%s7 + $0x3c0] sm:$0xff]
  %v1349 = vld [vmem:[%s7 + $0x3c8] sm:$0xff]
  %v1350 = vld [vmem:[%s7 + $0x3d0] sm:$0xff]
  %v1351 = vld [vmem:[%s7 + $0x3d8] sm:$0xff]
  %v1352 = vld [vmem:[%s7 + $0x3e0] sm:$0xff]
  %v1353 = vld [vmem:[%s7 + $0x3e8] sm:$0xff]
  %v1354 = vld [vmem:[%s7 + $0x3f0] sm:$0xff]
  %v1355 = vld [vmem:[%s7 + $0x3f8] sm:$0xff]
  %1356 = vmatprep.subr.mxu0 %v1229
  %1357 = vmatpush1.msra.mxu0 %v1228
  %1358 = vmatprep.subr.mxu0 %v1237
  %1359 = vmatpush1.msra.mxu0 %v1236
  %1360 = vmatprep.subr.mxu0 %v1245
  %1361 = vmatpush1.msra.mxu0 %v1244
  %1362 = vmatprep.subr.mxu0 %v1253
  %1363 = vmatpush1.msra.mxu0 %v1252
  %1364 = vmatprep.subr.mxu0 %v1261
  %1365 = vmatpush1.msra.mxu0 %v1260
  %1366 = vmatprep.subr.mxu0 %v1269
  %1367 = vmatpush1.msra.mxu0 %v1268
  %1368 = vmatprep.subr.mxu0 %v1277
  %1369 = vmatpush1.msra.mxu0 %v1276
  %1370 = vmatprep.subr.mxu0 %v1285
  %1371 = vmatpush1.msra.mxu0 %v1284
  %1372 = vmatprep.subr.mxu0 %v1293
  %1373 = vmatpush1.msra.mxu0 %v1292
  %1374 = vmatprep.subr.mxu0 %v1301
  %1375 = vmatpush1.msra.mxu0 %v1300
  %1376 = vmatprep.subr.mxu0 %v1309
  %1377 = vmatpush1.msra.mxu0 %v1308
  %1378 = vmatprep.subr.mxu0 %v1317
  %1379 = vmatpush1.msra.mxu0 %v1316
  %1380 = vmatprep.subr.mxu0 %v1325
  %1381 = vmatpush1.msra.mxu0 %v1324
  %1382 = vmatprep.subr.mxu0 %v1333
  %1383 = vmatpush1.msra.mxu0 %v1332
  %1384 = vmatprep.subr.mxu0 %v1341
  %1385 = vmatpush1.msra.mxu0 %v1340
  %1386 = vmatprep.subr.mxu0 %v1349
  %1387 = vmatpush1.msra.mxu0 %v1348
  %1388 = vmatprep.subr.mxu0 0.0
  %1389 = vmatpush1.msra.mxu0 0.0
  %1390 = vmatprep.subr.mxu0 0.0
  %1391 = vmatpush1.msra.mxu0 0.0
  %1392 = vmatprep.subr.mxu0 0.0
  %1393 = vmatpush1.msra.mxu0 0.0
  %1394 = vmatprep.subr.mxu0 0.0
  %1395 = vmatpush1.msra.mxu0 0.0
  %1396 = vmatprep.subr.mxu0 0.0
  %1397 = vmatpush1.msra.mxu0 0.0
  %1398 = vmatprep.subr.mxu0 0.0
  %1399 = vmatpush1.msra.mxu0 0.0
  %1400 = vmatprep.subr.mxu0 0.0
  %1401 = vmatpush1.msra.mxu0 0.0
  %1402 = vmatprep.subr.mxu0 0.0
  %1403 = vmatpush1.msra.mxu0 0.0
  %1404 = vmatprep.subr.mxu0 0.0
  %1405 = vmatpush1.msra.mxu0 0.0
  %1406 = vmatprep.subr.mxu0 0.0
  %1407 = vmatpush1.msra.mxu0 0.0
  %1408 = vmatprep.subr.mxu0 0.0
  %1409 = vmatpush1.msra.mxu0 0.0
  %1410 = vmatprep.subr.mxu0 0.0
  %1411 = vmatpush1.msra.mxu0 0.0
  %1412 = vmatprep.subr.mxu0 0.0
  %1413 = vmatpush1.msra.mxu0 0.0
  %1414 = vmatprep.subr.mxu0 0.0
  %1415 = vmatpush1.msra.mxu0 0.0
  %1416 = vmatprep.subr.mxu0 0.0
  %1417 = vmatpush1.msra.mxu0 0.0
  %1418 = vmatprep.subr.mxu0 0.0
  %1419 = vmatpush1.msra.mxu0 0.0
  %1420 = vmatprep.mubr.f32.mxu0 0.0
  %1421 = vmatmul.mubr.f32.gmra.mrb[0].mxu0 %v1220
  %v1422 = vpop.f32.mrb[0].mxu0
  %v1423 = vadd.f32 0.0, %v1422
  %v1424 = vpop.f32.mrb[0].mxu0
  %v1425 = vadd.f32 0.0, %v1424
  %1426 = vmatprep.mubr.f32.mxu0 0.0
  %1427 = vmatmul.mubr.f32.gmra.mrb[0].mxu0 %v1225
  %v1428 = vpop.f32.mrb[0].mxu0
  %v1429 = vadd.f32 0.0, %v1428
  %v1430 = vpop.f32.mrb[0].mxu0
  %v1431 = vadd.f32 0.0, %v1430
  %1432 = vdwg.mxu0
  %1433 = vmatprep.subr.mxu0 %v1231
  %1434 = vmatpush1.msra.mxu0 %v1230
  %1435 = vmatprep.subr.mxu0 %v1239
  %1436 = vmatpush1.msra.mxu0 %v1238
  %1437 = vmatprep.subr.mxu0 %v1247
  %1438 = vmatpush1.msra.mxu0 %v1246
  %1439 = vmatprep.subr.mxu0 %v1255
  %1440 = vmatpush1.msra.mxu0 %v1254
  %1441 = vmatprep.subr.mxu0 %v1263
  %1442 = vmatpush1.msra.mxu0 %v1262
  %1443 = vmatprep.subr.mxu0 %v1271
  %1444 = vmatpush1.msra.mxu0 %v1270
  %1445 = vmatprep.subr.mxu0 %v1279
  %1446 = vmatpush1.msra.mxu0 %v1278
  %1447 = vmatprep.subr.mxu0 %v1287
  %1448 = vmatpush1.msra.mxu0 %v1286
  %1449 = vmatprep.subr.mxu0 %v1295
  %1450 = vmatpush1.msra.mxu0 %v1294
  %1451 = vmatprep.subr.mxu0 %v1303
  %1452 = vmatpush1.msra.mxu0 %v1302
  %1453 = vmatprep.subr.mxu0 %v1311
  %1454 = vmatpush1.msra.mxu0 %v1310
  %1455 = vmatprep.subr.mxu0 %v1319
  %1456 = vmatpush1.msra.mxu0 %v1318
  %1457 = vmatprep.subr.mxu0 %v1327
  %1458 = vmatpush1.msra.mxu0 %v1326
  %1459 = vmatprep.subr.mxu0 %v1335
  %1460 = vmatpush1.msra.mxu0 %v1334
  %1461 = vmatprep.subr.mxu0 %v1343
  %1462 = vmatpush1.msra.mxu0 %v1342
  %1463 = vmatprep.subr.mxu0 %v1351
  %1464 = vmatpush1.msra.mxu0 %v1350
  %1465 = vmatprep.subr.mxu0 0.0
  %1466 = vmatpush1.msra.mxu0 0.0
  %1467 = vmatprep.subr.mxu0 0.0
  %1468 = vmatpush1.msra.mxu0 0.0
  %1469 = vmatprep.subr.mxu0 0.0
  %1470 = vmatpush1.msra.mxu0 0.0
  %1471 = vmatprep.subr.mxu0 0.0
  %1472 = vmatpush1.msra.mxu0 0.0
  %1473 = vmatprep.subr.mxu0 0.0
  %1474 = vmatpush1.msra.mxu0 0.0
  %1475 = vmatprep.subr.mxu0 0.0
  %1476 = vmatpush1.msra.mxu0 0.0
  %1477 = vmatprep.subr.mxu0 0.0
  %1478 = vmatpush1.msra.mxu0 0.0
  %1479 = vmatprep.subr.mxu0 0.0
  %1480 = vmatpush1.msra.mxu0 0.0
  %1481 = vmatprep.subr.mxu0 0.0
  %1482 = vmatpush1.msra.mxu0 0.0
  %1483 = vmatprep.subr.mxu0 0.0
  %1484 = vmatpush1.msra.mxu0 0.0
  %1485 = vmatprep.subr.mxu0 0.0
  %1486 = vmatpush1.msra.mxu0 0.0
  %1487 = vmatprep.subr.mxu0 0.0
  %1488 = vmatpush1.msra.mxu0 0.0
  %1489 = vmatprep.subr.mxu0 0.0
  %1490 = vmatpush1.msra.mxu0 0.0
  %1491 = vmatprep.subr.mxu0 0.0
  %1492 = vmatpush1.msra.mxu0 0.0
  %1493 = vmatprep.subr.mxu0 0.0
  %1494 = vmatpush1.msra.mxu0 0.0
  %1495 = vmatprep.subr.mxu0 0.0
  %1496 = vmatpush1.msra.mxu0 0.0
  %1497 = vmatprep.mubr.f32.mxu0 0.0
  %1498 = vmatmul.mubr.f32.gmra.mrb[0].mxu0 %v1220
  %v1499 = vpop.f32.mrb[0].mxu0
  %v1500 = vadd.f32 0.0, %v1499
  %v1501 = vpop.f32.mrb[0].mxu0
  %v1502 = vadd.f32 0.0, %v1501
  %1503 = vmatprep.mubr.f32.mxu0 0.0
  %1504 = vmatmul.mubr.f32.gmra.mrb[0].mxu0 %v1225
  %v1505 = vpop.f32.mrb[0].mxu0
  %v1506 = vadd.f32 0.0, %v1505
  %v1507 = vpop.f32.mrb[0].mxu0
  %v1508 = vadd.f32 0.0, %v1507
  %1509 = vdwg.mxu0
  %1510 = vmatprep.subr.mxu0 %v1233
  %1511 = vmatpush1.msra.mxu0 %v1232
  %1512 = vmatprep.subr.mxu0 %v1241
  %1513 = vmatpush1.msra.mxu0 %v1240
  %1514 = vmatprep.subr.mxu0 %v1249
  %1515 = vmatpush1.msra.mxu0 %v1248
  %1516 = vmatprep.subr.mxu0 %v1257
  %1517 = vmatpush1.msra.mxu0 %v1256
  %1518 = vmatprep.subr.mxu0 %v1265
  %1519 = vmatpush1.msra.mxu0 %v1264
  %1520 = vmatprep.subr.mxu0 %v1273
  %1521 = vmatpush1.msra.mxu0 %v1272
  %1522 = vmatprep.subr.mxu0 %v1281
  %1523 = vmatpush1.msra.mxu0 %v1280
  %1524 = vmatprep.subr.mxu0 %v1289
  %1525 = vmatpush1.msra.mxu0 %v1288
  %1526 = vmatprep.subr.mxu0 %v1297
  %1527 = vmatpush1.msra.mxu0 %v1296
  %1528 = vmatprep.subr.mxu0 %v1305
  %1529 = vmatpush1.msra.mxu0 %v1304
  %1530 = vmatprep.subr.mxu0 %v1313
  %1531 = vmatpush1.msra.mxu0 %v1312
  %1532 = vmatprep.subr.mxu0 %v1321
  %1533 = vmatpush1.msra.mxu0 %v1320
  %1534 = vmatprep.subr.mxu0 %v1329
  %1535 = vmatpush1.msra.mxu0 %v1328
  %1536 = vmatprep.subr.mxu0 %v1337
  %1537 = vmatpush1.msra.mxu0 %v1336
  %1538 = vmatprep.subr.mxu0 %v1345
  %1539 = vmatpush1.msra.mxu0 %v1344
  %1540 = vmatprep.subr.mxu0 %v1353
  %1541 = vmatpush1.msra.mxu0 %v1352
  %1542 = vmatprep.subr.mxu0 0.0
  %1543 = vmatpush1.msra.mxu0 0.0
  %1544 = vmatprep.subr.mxu0 0.0
  %1545 = vmatpush1.msra.mxu0 0.0
  %1546 = vmatprep.subr.mxu0 0.0
  %1547 = vmatpush1.msra.mxu0 0.0
  %1548 = vmatprep.subr.mxu0 0.0
  %1549 = vmatpush1.msra.mxu0 0.0
  %1550 = vmatprep.subr.mxu0 0.0
  %1551 = vmatpush1.msra.mxu0 0.0
  %1552 = vmatprep.subr.mxu0 0.0
  %1553 = vmatpush1.msra.mxu0 0.0
  %1554 = vmatprep.subr.mxu0 0.0
  %1555 = vmatpush1.msra.mxu0 0.0
  %1556 = vmatprep.subr.mxu0 0.0
  %1557 = vmatpush1.msra.mxu0 0.0
  %1558 = vmatprep.subr.mxu0 0.0
  %1559 = vmatpush1.msra.mxu0 0.0
  %1560 = vmatprep.subr.mxu0 0.0
  %1561 = vmatpush1.msra.mxu0 0.0
  %1562 = vmatprep.subr.mxu0 0.0
  %1563 = vmatpush1.msra.mxu0 0.0
  %1564 = vmatprep.subr.mxu0 0.0
  %1565 = vmatpush1.msra.mxu0 0.0
  %1566 = vmatprep.subr.mxu0 0.0
  %1567 = vmatpush1.msra.mxu0 0.0
  %1568 = vmatprep.subr.mxu0 0.0
  %1569 = vmatpush1.msra.mxu0 0.0
  %1570 = vmatprep.subr.mxu0 0.0
  %1571 = vmatpush1.msra.mxu0 0.0
  %1572 = vmatprep.subr.mxu0 0.0
  %1573 = vmatpush1.msra.mxu0 0.0
  %1574 = vmatprep.mubr.f32.mxu0 0.0
  %1575 = vmatmul.mubr.f32.gmra.mrb[0].mxu0 %v1220
  %v1576 = vpop.f32.mrb[0].mxu0
  %v1577 = vadd.f32 0.0, %v1576
  %v1578 = vpop.f32.mrb[0].mxu0
  %v1579 = vadd.f32 0.0, %v1578
  %1580 = vmatprep.mubr.f32.mxu0 0.0
  %1581 = vmatmul.mubr.f32.gmra.mrb[0].mxu0 %v1225
  %v1582 = vpop.f32.mrb[0].mxu0
  %v1583 = vadd.f32 0.0, %v1582
  %v1584 = vpop.f32.mrb[0].mxu0
  %v1585 = vadd.f32 0.0, %v1584
  %1586 = vdwg.mxu0
  %1587 = vmatprep.subr.mxu0 %v1235
  %1588 = vmatpush1.msra.mxu0 %v1234
  %1589 = vmatprep.subr.mxu0 %v1243
  %1590 = vmatpush1.msra.mxu0 %v1242
  %1591 = vmatprep.subr.mxu0 %v1251
  %1592 = vmatpush1.msra.mxu0 %v1250
  %1593 = vmatprep.subr.mxu0 %v1259
  %1594 = vmatpush1.msra.mxu0 %v1258
  %1595 = vmatprep.subr.mxu0 %v1267
  %1596 = vmatpush1.msra.mxu0 %v1266
  %1597 = vmatprep.subr.mxu0 %v1275
  %1598 = vmatpush1.msra.mxu0 %v1274
  %1599 = vmatprep.subr.mxu0 %v1283
  %1600 = vmatpush1.msra.mxu0 %v1282
  %1601 = vmatprep.subr.mxu0 %v1291
  %1602 = vmatpush1.msra.mxu0 %v1290
  %1603 = vmatprep.subr.mxu0 %v1299
  %1604 = vmatpush1.msra.mxu0 %v1298
  %1605 = vmatprep.subr.mxu0 %v1307
  %1606 = vmatpush1.msra.mxu0 %v1306
  %1607 = vmatprep.subr.mxu0 %v1315
  %1608 = vmatpush1.msra.mxu0 %v1314
  %1609 = vmatprep.subr.mxu0 %v1323
  %1610 = vmatpush1.msra.mxu0 %v1322
  %1611 = vmatprep.subr.mxu0 %v1331
  %1612 = vmatpush1.msra.mxu0 %v1330
  %1613 = vmatprep.subr.mxu0 %v1339
  %1614 = vmatpush1.msra.mxu0 %v1338
  %1615 = vmatprep.subr.mxu0 %v1347
  %1616 = vmatpush1.msra.mxu0 %v1346
  %1617 = vmatprep.subr.mxu0 %v1355
  %1618 = vmatpush1.msra.mxu0 %v1354
  %1619 = vmatprep.subr.mxu0 0.0
  %1620 = vmatpush1.msra.mxu0 0.0
  %1621 = vmatprep.subr.mxu0 0.0
  %1622 = vmatpush1.msra.mxu0 0.0
  %1623 = vmatprep.subr.mxu0 0.0
  %1624 = vmatpush1.msra.mxu0 0.0
  %1625 = vmatprep.subr.mxu0 0.0
  %1626 = vmatpush1.msra.mxu0 0.0
  %1627 = vmatprep.subr.mxu0 0.0
  %1628 = vmatpush1.msra.mxu0 0.0
  %1629 = vmatprep.subr.mxu0 0.0
  %1630 = vmatpush1.msra.mxu0 0.0
  %1631 = vmatprep.subr.mxu0 0.0
  %1632 = vmatpush1.msra.mxu0 0.0
  %1633 = vmatprep.subr.mxu0 0.0
  %1634 = vmatpush1.msra.mxu0 0.0
  %1635 = vmatprep.subr.mxu0 0.0
  %1636 = vmatpush1.msra.mxu0 0.0
  %1637 = vmatprep.subr.mxu0 0.0
  %1638 = vmatpush1.msra.mxu0 0.0
  %1639 = vmatprep.subr.mxu0 0.0
  %1640 = vmatpush1.msra.mxu0 0.0
  %1641 = vmatprep.subr.mxu0 0.0
  %1642 = vmatpush1.msra.mxu0 0.0
  %1643 = vmatprep.subr.mxu0 0.0
  %1644 = vmatpush1.msra.mxu0 0.0
  %1645 = vmatprep.subr.mxu0 0.0
  %1646 = vmatpush1.msra.mxu0 0.0
  %1647 = vmatprep.subr.mxu0 0.0
  %1648 = vmatpush1.msra.mxu0 0.0
  %1649 = vmatprep.subr.mxu0 0.0
  %1650 = vmatpush1.msra.mxu0 0.0
  %1651 = vmatprep.mubr.f32.mxu0 0.0
  %1652 = vmatmul.mubr.f32.gmra.mrb[0].mxu0 %v1220
  %v1653 = vpop.f32.mrb[0].mxu0
  %v1654 = vadd.f32 0.0, %v1653
  %v1655 = vpop.f32.mrb[0].mxu0
  %v1656 = vadd.f32 0.0, %v1655
  %1657 = vmatprep.mubr.f32.mxu0 0.0
  %1658 = vmatmul.mubr.f32.gmra.mrb[0].mxu0 %v1225
  %v1659 = vpop.f32.mrb[0].mxu0
  %v1660 = vadd.f32 0.0, %v1659
  %v1661 = vpop.f32.mrb[0].mxu0
  %v1662 = vadd.f32 0.0, %v1661
  %1663 = vdwg.mxu0
  %v1664 = vmul.f32 %v1423, %v1126
  %v1665 = vmul.f32 %v1425, %v1126
  %v1666 = vmul.f32 %v1500, %v1126
  %v1667 = vmul.f32 %v1502, %v1126
  %v1668 = vmul.f32 %v1577, %v1126
  %v1669 = vmul.f32 %v1579, %v1126
  %v1670 = vmul.f32 %v1654, %v1126
  %v1671 = vmul.f32 %v1656, %v1126
  %v1672 = vmul.f32 %v1429, %v1128
  %v1673 = vmul.f32 %v1431, %v1128
  %v1674 = vmul.f32 %v1506, %v1128
  %v1675 = vmul.f32 %v1508, %v1128
  %v1676 = vmul.f32 %v1583, %v1128
  %v1677 = vmul.f32 %v1585, %v1128
  %v1678 = vmul.f32 %v1660, %v1128
  %v1679 = vmul.f32 %v1662, %v1128
  %v1680 = vld [vmem:[%s8] sm:$0xff]
  %v1681 = vld [vmem:[%s8 + $0x8] sm:$0xff]
  %v1682 = vld [vmem:[%s8 + $0x10] sm:$0xff]
  %v1683 = vld [vmem:[%s8 + $0x18] sm:$0xff]
  %v1684 = vld [vmem:[%s8 + $0x20] sm:$0xff]
  %v1685 = vld [vmem:[%s8 + $0x28] sm:$0xff]
  %v1686 = vld [vmem:[%s8 + $0x30] sm:$0xff]
  %v1687 = vld [vmem:[%s8 + $0x38] sm:$0xff]
  %v1688 = vld [vmem:[%s8 + $0x40] sm:$0xff]
  %v1689 = vld [vmem:[%s8 + $0x48] sm:$0xff]
  %v1690 = vld [vmem:[%s8 + $0x50] sm:$0xff]
  %v1691 = vld [vmem:[%s8 + $0x58] sm:$0xff]
  %v1692 = vld [vmem:[%s8 + $0x60] sm:$0xff]
  %v1693 = vld [vmem:[%s8 + $0x68] sm:$0xff]
  %v1694 = vld [vmem:[%s8 + $0x70] sm:$0xff]
  %v1695 = vld [vmem:[%s8 + $0x78] sm:$0xff]
  %v1696 = vld [vmem:[%s8 + $0x80] sm:$0xff]
  %v1697 = vld [vmem:[%s8 + $0x88] sm:$0xff]
  %v1698 = vld [vmem:[%s8 + $0x90] sm:$0xff]
  %v1699 = vld [vmem:[%s8 + $0x98] sm:$0xff]
  %v1700 = vld [vmem:[%s8 + $0xa0] sm:$0xff]
  %v1701 = vld [vmem:[%s8 + $0xa8] sm:$0xff]
  %v1702 = vld [vmem:[%s8 + $0xb0] sm:$0xff]
  %v1703 = vld [vmem:[%s8 + $0xb8] sm:$0xff]
  %v1704 = vld [vmem:[%s8 + $0xc0] sm:$0xff]
  %v1705 = vld [vmem:[%s8 + $0xc8] sm:$0xff]
  %v1706 = vld [vmem:[%s8 + $0xd0] sm:$0xff]
  %v1707 = vld [vmem:[%s8 + $0xd8] sm:$0xff]
  %v1708 = vld [vmem:[%s8 + $0xe0] sm:$0xff]
  %v1709 = vld [vmem:[%s8 + $0xe8] sm:$0xff]
  %v1710 = vld [vmem:[%s8 + $0xf0] sm:$0xff]
  %v1711 = vld [vmem:[%s8 + $0xf8] sm:$0xff]
  %v1712 = vld [vmem:[%s8 + $0x100] sm:$0xff]
  %v1713 = vld [vmem:[%s8 + $0x108] sm:$0xff]
  %v1714 = vld [vmem:[%s8 + $0x110] sm:$0xff]
  %v1715 = vld [vmem:[%s8 + $0x118] sm:$0xff]
  %v1716 = vld [vmem:[%s8 + $0x120] sm:$0xff]
  %v1717 = vld [vmem:[%s8 + $0x128] sm:$0xff]
  %v1718 = vld [vmem:[%s8 + $0x130] sm:$0xff]
  %v1719 = vld [vmem:[%s8 + $0x138] sm:$0xff]
  %v1720 = vld [vmem:[%s8 + $0x140] sm:$0xff]
  %v1721 = vld [vmem:[%s8 + $0x148] sm:$0xff]
  %v1722 = vld [vmem:[%s8 + $0x150] sm:$0xff]
  %v1723 = vld [vmem:[%s8 + $0x158] sm:$0xff]
  %v1724 = vld [vmem:[%s8 + $0x160] sm:$0xff]
  %v1725 = vld [vmem:[%s8 + $0x168] sm:$0xff]
  %v1726 = vld [vmem:[%s8 + $0x170] sm:$0xff]
  %v1727 = vld [vmem:[%s8 + $0x178] sm:$0xff]
  %v1728 = vld [vmem:[%s8 + $0x180] sm:$0xff]
  %v1729 = vld [vmem:[%s8 + $0x188] sm:$0xff]
  %v1730 = vld [vmem:[%s8 + $0x190] sm:$0xff]
  %v1731 = vld [vmem:[%s8 + $0x198] sm:$0xff]
  %v1732 = vld [vmem:[%s8 + $0x1a0] sm:$0xff]
  %v1733 = vld [vmem:[%s8 + $0x1a8] sm:$0xff]
  %v1734 = vld [vmem:[%s8 + $0x1b0] sm:$0xff]
  %v1735 = vld [vmem:[%s8 + $0x1b8] sm:$0xff]
  %v1736 = vld [vmem:[%s8 + $0x1c0] sm:$0xff]
  %v1737 = vld [vmem:[%s8 + $0x1c8] sm:$0xff]
  %v1738 = vld [vmem:[%s8 + $0x1d0] sm:$0xff]
  %v1739 = vld [vmem:[%s8 + $0x1d8] sm:$0xff]
  %v1740 = vld [vmem:[%s8 + $0x1e0] sm:$0xff]
  %v1741 = vld [vmem:[%s8 + $0x1e8] sm:$0xff]
  %v1742 = vld [vmem:[%s8 + $0x1f0] sm:$0xff]
  %v1743 = vld [vmem:[%s8 + $0x1f8] sm:$0xff]
  %v1744 = vld [vmem:[%s8 + $0x200] sm:$0xff]
  %v1745 = vld [vmem:[%s8 + $0x208] sm:$0xff]
  %v1746 = vld [vmem:[%s8 + $0x210] sm:$0xff]
  %v1747 = vld [vmem:[%s8 + $0x218] sm:$0xff]
  %v1748 = vld [vmem:[%s8 + $0x220] sm:$0xff]
  %v1749 = vld [vmem:[%s8 + $0x228] sm:$0xff]
  %v1750 = vld [vmem:[%s8 + $0x230] sm:$0xff]
  %v1751 = vld [vmem:[%s8 + $0x238] sm:$0xff]
  %v1752 = vld [vmem:[%s8 + $0x240] sm:$0xff]
  %v1753 = vld [vmem:[%s8 + $0x248] sm:$0xff]
  %v1754 = vld [vmem:[%s8 + $0x250] sm:$0xff]
  %v1755 = vld [vmem:[%s8 + $0x258] sm:$0xff]
  %v1756 = vld [vmem:[%s8 + $0x260] sm:$0xff]
  %v1757 = vld [vmem:[%s8 + $0x268] sm:$0xff]
  %v1758 = vld [vmem:[%s8 + $0x270] sm:$0xff]
  %v1759 = vld [vmem:[%s8 + $0x278] sm:$0xff]
  %v1760 = vld [vmem:[%s8 + $0x280] sm:$0xff]
  %v1761 = vld [vmem:[%s8 + $0x288] sm:$0xff]
  %v1762 = vld [vmem:[%s8 + $0x290] sm:$0xff]
  %v1763 = vld [vmem:[%s8 + $0x298] sm:$0xff]
  %v1764 = vld [vmem:[%s8 + $0x2a0] sm:$0xff]
  %v1765 = vld [vmem:[%s8 + $0x2a8] sm:$0xff]
  %v1766 = vld [vmem:[%s8 + $0x2b0] sm:$0xff]
  %v1767 = vld [vmem:[%s8 + $0x2b8] sm:$0xff]
  %v1768 = vld [vmem:[%s8 + $0x2c0] sm:$0xff]
  %v1769 = vld [vmem:[%s8 + $0x2c8] sm:$0xff]
  %v1770 = vld [vmem:[%s8 + $0x2d0] sm:$0xff]
  %v1771 = vld [vmem:[%s8 + $0x2d8] sm:$0xff]
  %v1772 = vld [vmem:[%s8 + $0x2e0] sm:$0xff]
  %v1773 = vld [vmem:[%s8 + $0x2e8] sm:$0xff]
  %v1774 = vld [vmem:[%s8 + $0x2f0] sm:$0xff]
  %v1775 = vld [vmem:[%s8 + $0x2f8] sm:$0xff]
  %v1776 = vld [vmem:[%s8 + $0x300] sm:$0xff]
  %v1777 = vld [vmem:[%s8 + $0x308] sm:$0xff]
  %v1778 = vld [vmem:[%s8 + $0x310] sm:$0xff]
  %v1779 = vld [vmem:[%s8 + $0x318] sm:$0xff]
  %v1780 = vld [vmem:[%s8 + $0x320] sm:$0xff]
  %v1781 = vld [vmem:[%s8 + $0x328] sm:$0xff]
  %v1782 = vld [vmem:[%s8 + $0x330] sm:$0xff]
  %v1783 = vld [vmem:[%s8 + $0x338] sm:$0xff]
  %v1784 = vld [vmem:[%s8 + $0x340] sm:$0xff]
  %v1785 = vld [vmem:[%s8 + $0x348] sm:$0xff]
  %v1786 = vld [vmem:[%s8 + $0x350] sm:$0xff]
  %v1787 = vld [vmem:[%s8 + $0x358] sm:$0xff]
  %v1788 = vld [vmem:[%s8 + $0x360] sm:$0xff]
  %v1789 = vld [vmem:[%s8 + $0x368] sm:$0xff]
  %v1790 = vld [vmem:[%s8 + $0x370] sm:$0xff]
  %v1791 = vld [vmem:[%s8 + $0x378] sm:$0xff]
  %v1792 = vld [vmem:[%s8 + $0x380] sm:$0xff]
  %v1793 = vld [vmem:[%s8 + $0x388] sm:$0xff]
  %v1794 = vld [vmem:[%s8 + $0x390] sm:$0xff]
  %v1795 = vld [vmem:[%s8 + $0x398] sm:$0xff]
  %v1796 = vld [vmem:[%s8 + $0x3a0] sm:$0xff]
  %v1797 = vld [vmem:[%s8 + $0x3a8] sm:$0xff]
  %v1798 = vld [vmem:[%s8 + $0x3b0] sm:$0xff]
  %v1799 = vld [vmem:[%s8 + $0x3b8] sm:$0xff]
  %v1800 = vld [vmem:[%s8 + $0x3c0] sm:$0xff]
  %v1801 = vld [vmem:[%s8 + $0x3c8] sm:$0xff]
  %v1802 = vld [vmem:[%s8 + $0x3d0] sm:$0xff]
  %v1803 = vld [vmem:[%s8 + $0x3d8] sm:$0xff]
  %v1804 = vld [vmem:[%s8 + $0x3e0] sm:$0xff]
  %v1805 = vld [vmem:[%s8 + $0x3e8] sm:$0xff]
  %v1806 = vld [vmem:[%s8 + $0x3f0] sm:$0xff]
  %v1807 = vld [vmem:[%s8 + $0x3f8] sm:$0xff]
  %1808 = vmatprep.subr.mxu0 0.0
  %1809 = vmatpush1.msra.mxu0 %v1680
  %1810 = vmatprep.subr.mxu0 0.0
  %1811 = vmatpush1.msra.mxu0 %v1681
  %1812 = vmatprep.subr.mxu0 0.0
  %1813 = vmatpush1.msra.mxu0 %v1682
  %1814 = vmatprep.subr.mxu0 0.0
  %1815 = vmatpush1.msra.mxu0 %v1683
  %1816 = vmatprep.subr.mxu0 0.0
  %1817 = vmatpush1.msra.mxu0 %v1684
  %1818 = vmatprep.subr.mxu0 0.0
  %1819 = vmatpush1.msra.mxu0 %v1685
  %1820 = vmatprep.subr.mxu0 0.0
  %1821 = vmatpush1.msra.mxu0 %v1686
  %1822 = vmatprep.subr.mxu0 0.0
  %1823 = vmatpush1.msra.mxu0 %v1687
  %1824 = vmatprep.subr.mxu0 0.0
  %1825 = vmatpush1.msra.mxu0 %v1688
  %1826 = vmatprep.subr.mxu0 0.0
  %1827 = vmatpush1.msra.mxu0 %v1689
  %1828 = vmatprep.subr.mxu0 0.0
  %1829 = vmatpush1.msra.mxu0 %v1690
  %1830 = vmatprep.subr.mxu0 0.0
  %1831 = vmatpush1.msra.mxu0 %v1691
  %1832 = vmatprep.subr.mxu0 0.0
  %1833 = vmatpush1.msra.mxu0 %v1692
  %1834 = vmatprep.subr.mxu0 0.0
  %1835 = vmatpush1.msra.mxu0 %v1693
  %1836 = vmatprep.subr.mxu0 0.0
  %1837 = vmatpush1.msra.mxu0 %v1694
  %1838 = vmatprep.subr.mxu0 0.0
  %1839 = vmatpush1.msra.mxu0 %v1695
  %1840 = vmatprep.subr.mxu0 0.0
  %1841 = vmatpush1.msra.mxu0 %v1696
  %1842 = vmatprep.subr.mxu0 0.0
  %1843 = vmatpush1.msra.mxu0 %v1697
  %1844 = vmatprep.subr.mxu0 0.0
  %1845 = vmatpush1.msra.mxu0 %v1698
  %1846 = vmatprep.subr.mxu0 0.0
  %1847 = vmatpush1.msra.mxu0 %v1699
  %1848 = vmatprep.subr.mxu0 0.0
  %1849 = vmatpush1.msra.mxu0 %v1700
  %1850 = vmatprep.subr.mxu0 0.0
  %1851 = vmatpush1.msra.mxu0 %v1701
  %1852 = vmatprep.subr.mxu0 0.0
  %1853 = vmatpush1.msra.mxu0 %v1702
  %1854 = vmatprep.subr.mxu0 0.0
  %1855 = vmatpush1.msra.mxu0 %v1703
  %1856 = vmatprep.subr.mxu0 0.0
  %1857 = vmatpush1.msra.mxu0 %v1704
  %1858 = vmatprep.subr.mxu0 0.0
  %1859 = vmatpush1.msra.mxu0 %v1705
  %1860 = vmatprep.subr.mxu0 0.0
  %1861 = vmatpush1.msra.mxu0 %v1706
  %1862 = vmatprep.subr.mxu0 0.0
  %1863 = vmatpush1.msra.mxu0 %v1707
  %1864 = vmatprep.subr.mxu0 0.0
  %1865 = vmatpush1.msra.mxu0 %v1708
  %1866 = vmatprep.subr.mxu0 0.0
  %1867 = vmatpush1.msra.mxu0 %v1709
  %1868 = vmatprep.subr.mxu0 0.0
  %1869 = vmatpush1.msra.mxu0 %v1710
  %1870 = vmatprep.subr.mxu0 0.0
  %1871 = vmatpush1.msra.mxu0 %v1711
  %1872 = vmatprep.mubr.f32.mxu0 %v1665
  %1873 = vmatmul.mubr.f32.gmra.mrb[0].mxu0 %v1664
  %v1874 = vpop.f32.mrb[0].mxu0
  %v1875 = vadd.f32 0.0, %v1874
  %v1876 = vpop.f32.mrb[0].mxu0
  %1877 = vmatprep.mubr.f32.mxu0 %v1673
  %1878 = vmatmul.mubr.f32.gmra.mrb[0].mxu0 %v1672
  %v1879 = vpop.f32.mrb[0].mxu0
  %v1880 = vadd.f32 0.0, %v1879
  %v1881 = vpop.f32.mrb[0].mxu0
  %1882 = vdwg.mxu0
  %1883 = vmatprep.subr.mxu0 0.0
  %1884 = vmatpush1.msra.mxu0 %v1712
  %1885 = vmatprep.subr.mxu0 0.0
  %1886 = vmatpush1.msra.mxu0 %v1713
  %1887 = vmatprep.subr.mxu0 0.0
  %1888 = vmatpush1.msra.mxu0 %v1714
  %1889 = vmatprep.subr.mxu0 0.0
  %1890 = vmatpush1.msra.mxu0 %v1715
  %1891 = vmatprep.subr.mxu0 0.0
  %1892 = vmatpush1.msra.mxu0 %v1716
  %1893 = vmatprep.subr.mxu0 0.0
  %1894 = vmatpush1.msra.mxu0 %v1717
  %1895 = vmatprep.subr.mxu0 0.0
  %1896 = vmatpush1.msra.mxu0 %v1718
  %1897 = vmatprep.subr.mxu0 0.0
  %1898 = vmatpush1.msra.mxu0 %v1719
  %1899 = vmatprep.subr.mxu0 0.0
  %1900 = vmatpush1.msra.mxu0 %v1720
  %1901 = vmatprep.subr.mxu0 0.0
  %1902 = vmatpush1.msra.mxu0 %v1721
  %1903 = vmatprep.subr.mxu0 0.0
  %1904 = vmatpush1.msra.mxu0 %v1722
  %1905 = vmatprep.subr.mxu0 0.0
  %1906 = vmatpush1.msra.mxu0 %v1723
  %1907 = vmatprep.subr.mxu0 0.0
  %1908 = vmatpush1.msra.mxu0 %v1724
  %1909 = vmatprep.subr.mxu0 0.0
  %1910 = vmatpush1.msra.mxu0 %v1725
  %1911 = vmatprep.subr.mxu0 0.0
  %1912 = vmatpush1.msra.mxu0 %v1726
  %1913 = vmatprep.subr.mxu0 0.0
  %1914 = vmatpush1.msra.mxu0 %v1727
  %1915 = vmatprep.subr.mxu0 0.0
  %1916 = vmatpush1.msra.mxu0 %v1728
  %1917 = vmatprep.subr.mxu0 0.0
  %1918 = vmatpush1.msra.mxu0 %v1729
  %1919 = vmatprep.subr.mxu0 0.0
  %1920 = vmatpush1.msra.mxu0 %v1730
  %1921 = vmatprep.subr.mxu0 0.0
  %1922 = vmatpush1.msra.mxu0 %v1731
  %1923 = vmatprep.subr.mxu0 0.0
  %1924 = vmatpush1.msra.mxu0 %v1732
  %1925 = vmatprep.subr.mxu0 0.0
  %1926 = vmatpush1.msra.mxu0 %v1733
  %1927 = vmatprep.subr.mxu0 0.0
  %1928 = vmatpush1.msra.mxu0 %v1734
  %1929 = vmatprep.subr.mxu0 0.0
  %1930 = vmatpush1.msra.mxu0 %v1735
  %1931 = vmatprep.subr.mxu0 0.0
  %1932 = vmatpush1.msra.mxu0 %v1736
  %1933 = vmatprep.subr.mxu0 0.0
  %1934 = vmatpush1.msra.mxu0 %v1737
  %1935 = vmatprep.subr.mxu0 0.0
  %1936 = vmatpush1.msra.mxu0 %v1738
  %1937 = vmatprep.subr.mxu0 0.0
  %1938 = vmatpush1.msra.mxu0 %v1739
  %1939 = vmatprep.subr.mxu0 0.0
  %1940 = vmatpush1.msra.mxu0 %v1740
  %1941 = vmatprep.subr.mxu0 0.0
  %1942 = vmatpush1.msra.mxu0 %v1741
  %1943 = vmatprep.subr.mxu0 0.0
  %1944 = vmatpush1.msra.mxu0 %v1742
  %1945 = vmatprep.subr.mxu0 0.0
  %1946 = vmatpush1.msra.mxu0 %v1743
  %1947 = vmatprep.mubr.f32.mxu0 %v1667
  %1948 = vmatmul.mubr.f32.gmra.mrb[0].mxu0 %v1666
  %v1949 = vpop.f32.mrb[0].mxu0
  %v1950 = vadd.f32 %v1875, %v1949
  %v1951 = vpop.f32.mrb[0].mxu0
  %1952 = vmatprep.mubr.f32.mxu0 %v1675
  %1953 = vmatmul.mubr.f32.gmra.mrb[0].mxu0 %v1674
  %v1954 = vpop.f32.mrb[0].mxu0
  %v1955 = vadd.f32 %v1880, %v1954
  %v1956 = vpop.f32.mrb[0].mxu0
  %1957 = vdwg.mxu0
  %1958 = vmatprep.subr.mxu0 0.0
  %1959 = vmatpush1.msra.mxu0 %v1744
  %1960 = vmatprep.subr.mxu0 0.0
  %1961 = vmatpush1.msra.mxu0 %v1745
  %1962 = vmatprep.subr.mxu0 0.0
  %1963 = vmatpush1.msra.mxu0 %v1746
  %1964 = vmatprep.subr.mxu0 0.0
  %1965 = vmatpush1.msra.mxu0 %v1747
  %1966 = vmatprep.subr.mxu0 0.0
  %1967 = vmatpush1.msra.mxu0 %v1748
  %1968 = vmatprep.subr.mxu0 0.0
  %1969 = vmatpush1.msra.mxu0 %v1749
  %1970 = vmatprep.subr.mxu0 0.0
  %1971 = vmatpush1.msra.mxu0 %v1750
  %1972 = vmatprep.subr.mxu0 0.0
  %1973 = vmatpush1.msra.mxu0 %v1751
  %1974 = vmatprep.subr.mxu0 0.0
  %1975 = vmatpush1.msra.mxu0 %v1752
  %1976 = vmatprep.subr.mxu0 0.0
  %1977 = vmatpush1.msra.mxu0 %v1753
  %1978 = vmatprep.subr.mxu0 0.0
  %1979 = vmatpush1.msra.mxu0 %v1754
  %1980 = vmatprep.subr.mxu0 0.0
  %1981 = vmatpush1.msra.mxu0 %v1755
  %1982 = vmatprep.subr.mxu0 0.0
  %1983 = vmatpush1.msra.mxu0 %v1756
  %1984 = vmatprep.subr.mxu0 0.0
  %1985 = vmatpush1.msra.mxu0 %v1757
  %1986 = vmatprep.subr.mxu0 0.0
  %1987 = vmatpush1.msra.mxu0 %v1758
  %1988 = vmatprep.subr.mxu0 0.0
  %1989 = vmatpush1.msra.mxu0 %v1759
  %1990 = vmatprep.subr.mxu0 0.0
  %1991 = vmatpush1.msra.mxu0 %v1760
  %1992 = vmatprep.subr.mxu0 0.0
  %1993 = vmatpush1.msra.mxu0 %v1761
  %1994 = vmatprep.subr.mxu0 0.0
  %1995 = vmatpush1.msra.mxu0 %v1762
  %1996 = vmatprep.subr.mxu0 0.0
  %1997 = vmatpush1.msra.mxu0 %v1763
  %1998 = vmatprep.subr.mxu0 0.0
  %1999 = vmatpush1.msra.mxu0 %v1764
  %2000 = vmatprep.subr.mxu0 0.0
  %2001 = vmatpush1.msra.mxu0 %v1765
  %2002 = vmatprep.subr.mxu0 0.0
  %2003 = vmatpush1.msra.mxu0 %v1766
  %2004 = vmatprep.subr.mxu0 0.0
  %2005 = vmatpush1.msra.mxu0 %v1767
  %2006 = vmatprep.subr.mxu0 0.0
  %2007 = vmatpush1.msra.mxu0 %v1768
  %2008 = vmatprep.subr.mxu0 0.0
  %2009 = vmatpush1.msra.mxu0 %v1769
  %2010 = vmatprep.subr.mxu0 0.0
  %2011 = vmatpush1.msra.mxu0 %v1770
  %2012 = vmatprep.subr.mxu0 0.0
  %2013 = vmatpush1.msra.mxu0 %v1771
  %2014 = vmatprep.subr.mxu0 0.0
  %2015 = vmatpush1.msra.mxu0 %v1772
  %2016 = vmatprep.subr.mxu0 0.0
  %2017 = vmatpush1.msra.mxu0 %v1773
  %2018 = vmatprep.subr.mxu0 0.0
  %2019 = vmatpush1.msra.mxu0 %v1774
  %2020 = vmatprep.subr.mxu0 0.0
  %2021 = vmatpush1.msra.mxu0 %v1775
  %2022 = vmatprep.mubr.f32.mxu0 %v1669
  %2023 = vmatmul.mubr.f32.gmra.mrb[0].mxu0 %v1668
  %v2024 = vpop.f32.mrb[0].mxu0
  %v2025 = vadd.f32 %v1950, %v2024
  %v2026 = vpop.f32.mrb[0].mxu0
  %2027 = vmatprep.mubr.f32.mxu0 %v1677
  %2028 = vmatmul.mubr.f32.gmra.mrb[0].mxu0 %v1676
  %v2029 = vpop.f32.mrb[0].mxu0
  %v2030 = vadd.f32 %v1955, %v2029
  %v2031 = vpop.f32.mrb[0].mxu0
  %2032 = vdwg.mxu0
  %2033 = vmatprep.subr.mxu0 0.0
  %2034 = vmatpush1.msra.mxu0 %v1776
  %2035 = vmatprep.subr.mxu0 0.0
  %2036 = vmatpush1.msra.mxu0 %v1777
  %2037 = vmatprep.subr.mxu0 0.0
  %2038 = vmatpush1.msra.mxu0 %v1778
  %2039 = vmatprep.subr.mxu0 0.0
  %2040 = vmatpush1.msra.mxu0 %v1779
  %2041 = vmatprep.subr.mxu0 0.0
  %2042 = vmatpush1.msra.mxu0 %v1780
  %2043 = vmatprep.subr.mxu0 0.0
  %2044 = vmatpush1.msra.mxu0 %v1781
  %2045 = vmatprep.subr.mxu0 0.0
  %2046 = vmatpush1.msra.mxu0 %v1782
  %2047 = vmatprep.subr.mxu0 0.0
  %2048 = vmatpush1.msra.mxu0 %v1783
  %2049 = vmatprep.subr.mxu0 0.0
  %2050 = vmatpush1.msra.mxu0 %v1784
  %2051 = vmatprep.subr.mxu0 0.0
  %2052 = vmatpush1.msra.mxu0 %v1785
  %2053 = vmatprep.subr.mxu0 0.0
  %2054 = vmatpush1.msra.mxu0 %v1786
  %2055 = vmatprep.subr.mxu0 0.0
  %2056 = vmatpush1.msra.mxu0 %v1787
  %2057 = vmatprep.subr.mxu0 0.0
  %2058 = vmatpush1.msra.mxu0 %v1788
  %2059 = vmatprep.subr.mxu0 0.0
  %2060 = vmatpush1.msra.mxu0 %v1789
  %2061 = vmatprep.subr.mxu0 0.0
  %2062 = vmatpush1.msra.mxu0 %v1790
  %2063 = vmatprep.subr.mxu0 0.0
  %2064 = vmatpush1.msra.mxu0 %v1791
  %2065 = vmatprep.subr.mxu0 0.0
  %2066 = vmatpush1.msra.mxu0 %v1792
  %2067 = vmatprep.subr.mxu0 0.0
  %2068 = vmatpush1.msra.mxu0 %v1793
  %2069 = vmatprep.subr.mxu0 0.0
  %2070 = vmatpush1.msra.mxu0 %v1794
  %2071 = vmatprep.subr.mxu0 0.0
  %2072 = vmatpush1.msra.mxu0 %v1795
  %2073 = vmatprep.subr.mxu0 0.0
  %2074 = vmatpush1.msra.mxu0 %v1796
  %2075 = vmatprep.subr.mxu0 0.0
  %2076 = vmatpush1.msra.mxu0 %v1797
  %2077 = vmatprep.subr.mxu0 0.0
  %2078 = vmatpush1.msra.mxu0 %v1798
  %2079 = vmatprep.subr.mxu0 0.0
  %2080 = vmatpush1.msra.mxu0 %v1799
  %2081 = vmatprep.subr.mxu0 0.0
  %2082 = vmatpush1.msra.mxu0 %v1800
  %2083 = vmatprep.subr.mxu0 0.0
  %2084 = vmatpush1.msra.mxu0 %v1801
  %2085 = vmatprep.subr.mxu0 0.0
  %2086 = vmatpush1.msra.mxu0 %v1802
  %2087 = vmatprep.subr.mxu0 0.0
  %2088 = vmatpush1.msra.mxu0 %v1803
  %2089 = vmatprep.subr.mxu0 0.0
  %2090 = vmatpush1.msra.mxu0 %v1804
  %2091 = vmatprep.subr.mxu0 0.0
  %2092 = vmatpush1.msra.mxu0 %v1805
  %2093 = vmatprep.subr.mxu0 0.0
  %2094 = vmatpush1.msra.mxu0 %v1806
  %2095 = vmatprep.subr.mxu0 0.0
  %2096 = vmatpush1.msra.mxu0 %v1807
  %2097 = vmatprep.mubr.f32.mxu0 %v1671
  %2098 = vmatmul.mubr.f32.gmra.mrb[0].mxu0 %v1670
  %v2099 = vpop.f32.mrb[0].mxu0
  %v2100 = vadd.f32 %v2025, %v2099
  %v2101 = vpop.f32.mrb[0].mxu0
  %2102 = vmatprep.mubr.f32.mxu0 %v1679
  %2103 = vmatmul.mubr.f32.gmra.mrb[0].mxu0 %v1678
  %v2104 = vpop.f32.mrb[0].mxu0
  %v2105 = vadd.f32 %v2030, %v2104
  %v2106 = vpop.f32.mrb[0].mxu0
  %2107 = vdwg.mxu0
  %vm2108 = vcmask 64512
  %2109 = vst.msk [vmem:[%s9] sm:$0xff] %vm2108, %v2100
  %2110 = vst.msk [vmem:[%s9 + $0x8] sm:$0xff] %vm2108, %v2105
  // Predicated region
  $region38: #{edge_labeller_forward.1} parent=0 // pred_check
    _
  $region39: #{edge_labeller_forward.1} parent=0 // pred_check_branch
    %2112 = sbr.rel (0) target = $region41
  $region40: #{edge_labeller_forward.1} parent=0 // pred_region
    _
  $region41: #{edge_labeller_forward.1} parent=0 // pred_fallthru
    _
  // Predicated region
  $region42: #{edge_labeller_forward.1} parent=0 // pred_check
    _
  $region43: #{edge_labeller_forward.1} parent=0 // pred_check_branch
    %2114 = sbr.rel (0) target = $region45
  $region44: #{edge_labeller_forward.1} parent=0 // pred_region
    _
  $region45: #{edge_labeller_forward.1} parent=0 // pred_fallthru
    _

</llo_original>
